<compile_context>
chip_gen: v7x
topology: tpu7x:2x2x1
jax: 0.10.0
libtpu: 0.0.40
codegen_flags: <defaults>
</compile_context>

<pallas_src>
import functools

import numpy as np
import jax
import jax.numpy as jnp
from jax.experimental import pallas as pl
from jax.experimental.pallas import tpu as pltpu
from jax.flatten_util import ravel_pytree

GLOVE_DIM = 300

# ---- module-consistent config ("args") ----
WORD_EMBED_DIM = GLOVE_DIM
ENCODER_DIM = 64
FC_DIM = 128
N_CLASSES = 3
TRAIN_SIZE = 32          # self.lambda_x = ones(training_size)
BATCH = 8
SEQ = 16
INNER_LR = 0.1           # args.inner_update_lr
OUTER_LR = 0.1           # args.outer_update_lr
NU = 0.05                # args.nu
REG = 1e-4
HIST_LEN = 10

DP = 384                 # embed dim padded 300 -> 384 (MXU K / lane alignment)
CP = 128                 # class dim padded 3 -> 128 (lane-dense logits store)
NEG = -1e30              # finite -inf stand-in (avoids 0 * inf = nan)

VMEM = pl.BlockSpec(memory_space=pltpu.MemorySpace.VMEM)
SMEM = pl.BlockSpec(memory_space=pltpu.MemorySpace.SMEM)


def _flat_shape(n):
    rows = -(-n // 128)
    rows = -(-rows // 8) * 8
    return (rows, 128)


P_TOTAL = (WORD_EMBED_DIM * ENCODER_DIM + ENCODER_DIM
           + 4 * ENCODER_DIM * FC_DIM + FC_DIM
           + FC_DIM * N_CLASSES + N_CLASSES)
PSHAPE = _flat_shape(P_TOTAL)          # (416, 128) flattened parameter stream
LSHAPE = _flat_shape(TRAIN_SIZE)       # (8, 128)   flattened lambda stream


def to_2d(vec, shape2d):
    r, c = shape2d
    return jnp.pad(vec, (0, r * c - vec.shape[0])).reshape(r, c)


def from_2d(arr2d, n):
    return arr2d.reshape(-1)[:n]


# ------------------------------------------------------------------ kernels --

def fused_forward_kernel(s1_ref, s2_ref, lens_ref, wenc_ref, benc_ref,
                         w1_ref, b1_ref, w2_ref, b2_ref, labels_ref, wts_ref,
                         logits_ref, loss_ref, pred_ref):
    """Both encoders + classifier + weighted CE + argmax in one kernel.

    s1/s2: (B,T,DP) zero-padded embeddings, lens: (2B,1), wenc: (DP,E),
    benc: (1,E), w1: (4,E,FC) split weights, b1: (1,FC), w2: (FC,CP),
    b2: (1,CP) (NEG in padded class columns), labels: (B,1) int32, wts: (B,1).
    Outputs: logits (B,CP) lane-dense, loss (1,1), pred (B,1) int32.
    """
    B = s1_ref.shape[0]
    # Padding positions are already zero, so a plain sum is the masked sum.
    # The 1/len scale commutes through the matmul -> apply it after the
    # projection on E=64 lanes instead of DP=384.
    p1 = jnp.sum(s1_ref[...], axis=1)                         # (B, DP)
    p2 = jnp.sum(s2_ref[...], axis=1)
    pooled = jnp.concatenate([p1, p2], axis=0)                # (2B, DP)
    proj = jnp.dot(pooled, wenc_ref[...], preferred_element_type=jnp.float32)
    inv_len = pl.reciprocal(lens_ref[...], approx=True)       # EUP slot
    uv = proj * inv_len + benc_ref[...]                       # (2B, E)
    u = uv[:B]
    v = uv[B:]
    # split-weight InferSent head: avoids the (B, 4E) concat relayout.
    h = (jnp.dot(u, w1_ref[0], preferred_element_type=jnp.float32)
         + jnp.dot(v, w1_ref[1], preferred_element_type=jnp.float32)
         + jnp.dot(jnp.abs(u - v), w1_ref[2], preferred_element_type=jnp.float32)
         + jnp.dot(u * v, w1_ref[3], preferred_element_type=jnp.float32)
         + b1_ref[...])
    h = jnp.maximum(h, 0.0)
    logits = jnp.dot(h, w2_ref[...], preferred_element_type=jnp.float32) + b2_ref[...]
    logits_ref[...] = logits                                  # lane-dense store

    mx = jnp.max(logits, axis=1, keepdims=True)
    lse = mx + jnp.log(jnp.sum(jnp.exp(logits - mx), axis=1, keepdims=True))
    cls = jax.lax.broadcasted_iota(jnp.int32, logits.shape, 1)
    onehot = (cls == labels_ref[...]).astype(jnp.float32)
    ce = lse - jnp.sum(onehot * logits, axis=1, keepdims=True)          # (B, 1)
    loss_ref[...] = jnp.mean(wts_ref[...] * ce) * jnp.ones((1, 1), jnp.float32)
    pred_ref[...] = jnp.min(jnp.where(logits >= mx, cls, CP),
                            axis=1, keepdims=True)


def saga2_sgd_kernel(p_ref, g_ref, lastg_ref, sumg_ref, replg_ref,
                     h_ref, lasth_ref, sumh_ref, replh_ref,
                     icg_ref, ich_ref,
                     newp_ref, nsumg_ref, hvpu_ref, nsumh_ref, *, lr):
    """SAGA(G_grad_y) + SAGA(hvp) + inner SGD step over flattened params."""
    g = g_ref[...]
    new_sum_g = sumg_ref[...] + g - replg_ref[...]
    nsumg_ref[...] = new_sum_g
    g_upd = new_sum_g * icg_ref[0, 0] + g - lastg_ref[...]
    newp_ref[...] = p_ref[...] - lr * g_upd

    h = h_ref[...]
    new_sum_h = sumh_ref[...] + h - replh_ref[...]
    nsumh_ref[...] = new_sum_h
    hvpu_ref[...] = new_sum_h * ich_ref[0, 0] + h - lasth_ref[...]


def sagaF_z_kernel(z_ref, hvpu_ref, f_ref, lastf_ref, sumf_ref, replf_ref,
                   icf_ref, znew_ref, nsumf_ref, *, nu):
    """SAGA(F_grad_y) fused with the z_params update."""
    f = f_ref[...]
    new_sum_f = sumf_ref[...] + f - replf_ref[...]
    nsumf_ref[...] = new_sum_f
    f_upd = new_sum_f * icf_ref[0, 0] + f - lastf_ref[...]
    znew_ref[...] = z_ref[...] - nu * (hvpu_ref[...] - f_upd)


def sagaJ_lam_kernel(lam_ref, j_ref, lastj_ref, sumj_ref, replj_ref,
                     icj_ref, lamnew_ref, nsumj_ref, *, lr):
    """SAGA(Gyxz) fused with the outer SGD step on lambda_x."""
    jg = j_ref[...]
    new_sum_j = sumj_ref[...] + jg - replj_ref[...]
    nsumj_ref[...] = new_sum_j
    j_upd = new_sum_j * icj_ref[0, 0] + jg - lastj_ref[...]
    lamnew_ref[...] = lam_ref[...] - lr * j_upd


# ----------------------------------------------------------------- wrappers --

def fused_forward(params, s1, s2, l1, l2, labels, weights):
    """One pallas_call for the full predict() + CE/argmax hot path."""
    B = s1.shape[0]
    d, E = params['w_enc'].shape
    fc = params['w1'].shape[1]
    s1p = jnp.pad(s1, ((0, 0), (0, 0), (0, DP - d)))
    s2p = jnp.pad(s2, ((0, 0), (0, 0), (0, DP - d)))
    wenc = jnp.pad(params['w_enc'], ((0, DP - d), (0, 0)))
    w1s = params['w1'].reshape(4, E, fc)
    w2p = jnp.pad(params['w2'], ((0, 0), (0, CP - N_CLASSES)))
    b2p = jnp.concatenate(
        [params['b2'], jnp.full((CP - N_CLASSES,), NEG, jnp.float32)]).reshape(1, CP)
    lens = jnp.concatenate([l1, l2], axis=0)                  # (2B, 1)
    logits, loss, pred = pl.pallas_call(
        fused_forward_kernel,
        out_shape=(jax.ShapeDtypeStruct((B, CP), jnp.float32),
                   jax.ShapeDtypeStruct((1, 1), jnp.float32),
                   jax.ShapeDtypeStruct((B, 1), jnp.int32)),
        in_specs=[VMEM] * 11,
        out_specs=(VMEM, VMEM, VMEM),
    )(s1p, s2p, lens, wenc, params['b_enc'].reshape(1, E), w1s,
      params['b1'].reshape(1, fc), w2p, b2p,
      labels.reshape(B, 1).astype(jnp.int32),
      weights.reshape(B, 1).astype(jnp.float32))
    return logits[:, :N_CLASSES], loss[0, 0], pred[:, 0]


def saga2_sgd(p2d, g2d, last_g, sum_g, repl_g, h2d, last_h, sum_h, repl_h,
              ic_g, ic_h):
    return pl.pallas_call(
        functools.partial(saga2_sgd_kernel, lr=INNER_LR),
        out_shape=(jax.ShapeDtypeStruct(PSHAPE, jnp.float32),) * 4,
        in_specs=[VMEM] * 9 + [SMEM, SMEM],
        out_specs=(VMEM,) * 4,
        input_output_aliases={0: 0, 3: 1, 7: 3},
    )(p2d, g2d, last_g, sum_g, repl_g, h2d, last_h, sum_h, repl_h, ic_g, ic_h)


def sagaF_z(z2d, hvpu2d, f2d, last_f, sum_f, repl_f, ic_f):
    return pl.pallas_call(
        functools.partial(sagaF_z_kernel, nu=NU),
        out_shape=(jax.ShapeDtypeStruct(PSHAPE, jnp.float32),) * 2,
        in_specs=[VMEM] * 6 + [SMEM],
        out_specs=(VMEM,) * 2,
        input_output_aliases={0: 0, 4: 1},
    )(z2d, hvpu2d, f2d, last_f, sum_f, repl_f, ic_f)


def sagaJ_lam(lam2d, j2d, last_j, sum_j, repl_j, ic_j):
    return pl.pallas_call(
        functools.partial(sagaJ_lam_kernel, lr=OUTER_LR),
        out_shape=(jax.ShapeDtypeStruct(LSHAPE, jnp.float32),) * 2,
        in_specs=[VMEM] * 5 + [SMEM],
        out_specs=(VMEM,) * 2,
        input_output_aliases={0: 0, 3: 1},
    )(lam2d, j2d, last_j, sum_j, repl_j, ic_j)


# ---------------------------------------------- pure-JAX mirror (for grads) --

def encoder_jax(params, x, l):
    return (jnp.sum(x, axis=1) / l) @ params['w_enc'] + params['b_enc']


def predict_jax(params, inputs):
    s1, l1, s2, l2 = inputs
    u = encoder_jax(params, s1, l1)
    v = encoder_jax(params, s2, l2)
    feats = jnp.concatenate([u, v, jnp.abs(u - v), u * v], axis=1)
    h = jnp.maximum(feats @ params['w1'] + params['b1'], 0.0)
    return h @ params['w2'] + params['b2']


def ce_per_sample(logits, labels):
    lse = jax.nn.logsumexp(logits, axis=1)
    return lse - jnp.take_along_axis(logits, labels[:, None], axis=1)[:, 0]


def reg_term(params):
    return REG * jnp.sqrt(sum(jnp.sum(p * p)
                              for p in jax.tree_util.tree_leaves(params)))


def inner_loss_jax(params, lam, batch):
    inputs, labels, idx = batch
    logits = predict_jax(params, inputs)
    w = jax.nn.sigmoid(lam[idx])
    return jnp.mean(w * ce_per_sample(logits, labels)) + reg_term(params)


def q_loss_jax(params, batch):
    inputs, labels, _ = batch
    return jnp.mean(ce_per_sample(predict_jax(params, inputs), labels))


# --------------------------------------------------------- SAGA bookkeeping --

def init_saga_buf(shape2d):
    z = jnp.zeros(shape2d, jnp.float32)
    return {'hist': jnp.zeros((HIST_LEN,) + shape2d, jnp.float32),
            'sum': z, 'last': z, 'count': jnp.zeros((), jnp.int32)}


def saga_prepare(buf, grad2d, rand_slot):
    """Incremental history update: O(R*C) per step instead of O(K*R*C)."""
    count = buf['count']
    slot = jnp.where(count < HIST_LEN, count, rand_slot).astype(jnp.int32)
    replaced = jax.lax.dynamic_index_in_dim(buf['hist'], slot, axis=0,
                                            keepdims=False)
    new_hist = buf['hist'].at[slot].set(grad2d)
    new_count = jnp.minimum(count + 1, HIST_LEN)
    inv_count = (1.0 / new_count.astype(jnp.float32)).reshape(1, 1)
    return replaced, inv_count, new_hist, new_count


# ----------------------------------------------------------- one train step --

def learner_step(params, lam, z_params, state, train_batch, val_batch,
                 rand_slots):
    inputs, labels, idx = train_batch
    s1, l1, s2, l2 = inputs
    B = labels.shape[0]

    # ---- fused Pallas forward + sigmoid(lambda)-weighted CE (support batch) --
    _, wce, _ = fused_forward(params, s1, s2, l1, l2, labels,
                              jax.nn.sigmoid(lam[idx]))
    inner_loss = wce + reg_term(params)

    # ---- gradients / HVP from the pure-JAX mirror ----
    g_grad = jax.grad(inner_loss_jax)(params, lam, train_batch)
    hvp = jax.jvp(lambda p: jax.grad(inner_loss_jax)(p, lam, train_batch),
                  (params,), (z_params,))[1]

    p_flat, unravel = ravel_pytree(params)
    n_p = p_flat.shape[0]
    p2d = to_2d(p_flat, PSHAPE)
    g2d = to_2d(ravel_pytree(g_grad)[0], PSHAPE)
    h2d = to_2d(ravel_pytree(hvp)[0], PSHAPE)
    z2d = to_2d(ravel_pytree(z_params)[0], PSHAPE)

    repl_g, ic_g, hist_g, cnt_g = saga_prepare(state['G'], g2d, rand_slots[0])
    repl_h, ic_h, hist_h, cnt_h = saga_prepare(state['H'], h2d, rand_slots[1])
    newp2d, sum_g, hvpu2d, sum_h = saga2_sgd(
        p2d, g2d, state['G']['last'], state['G']['sum'], repl_g,
        h2d, state['H']['last'], state['H']['sum'], repl_h, ic_g, ic_h)
    new_params = unravel(from_2d(newp2d, n_p))

    # ---- fused Pallas query forward: plain mean CE + argmax predictions ----
    q_inputs, q_labels, _ = val_batch
    qs1, ql1, qs2, ql2 = q_inputs
    _, q_loss, q_pred = fused_forward(new_params, qs1, qs2, ql1, ql2, q_labels,
                                      jnp.ones((B,), jnp.float32))

    # ---- hypergradient: F-SAGA fused with the z_params update ----
    f_grad = jax.grad(q_loss_jax)(new_params, val_batch)
    f2d = to_2d(ravel_pytree(f_grad)[0], PSHAPE)
    repl_f, ic_f, hist_f, cnt_f = saga_prepare(state['F'], f2d, rand_slots[2])
    znew2d, sum_f = sagaF_z(z2d, hvpu2d, f2d, state['F']['last'],
                            state['F']['sum'], repl_f, ic_f)
    z_new = unravel(from_2d(znew2d, n_p))

    # Gyxz = d/dlam < grad_p inner_loss(new_params, lam), z_new >
    def gy_dot_z(lam_):
        return jax.jvp(lambda p: inner_loss_jax(p, lam_, train_batch),
                       (new_params,), (z_new,))[1]
    j_grad = jax.grad(gy_dot_z)(lam)
    j2d = to_2d(j_grad, LSHAPE)
    repl_j, ic_j, hist_j, cnt_j = saga_prepare(state['J'], j2d, rand_slots[3])
    lamnew2d, sum_j = sagaJ_lam(to_2d(lam, LSHAPE), j2d, state['J']['last'],
                                state['J']['sum'], repl_j, ic_j)
    lam_new = from_2d(lamnew2d, lam.shape[0])

    new_state = {
        'G': {'hist': hist_g, 'sum': sum_g, 'last': g2d, 'count': cnt_g},
        'H': {'hist': hist_h, 'sum': sum_h, 'last': h2d, 'count': cnt_h},
        'F': {'hist': hist_f, 'sum': sum_f, 'last': f2d, 'count': cnt_f},
        'J': {'hist': hist_j, 'sum': sum_j, 'last': j2d, 'count': cnt_j},
    }
    acc = jnp.mean((q_pred == q_labels).astype(jnp.float32))
    return new_params, lam_new, z_new, new_state, inner_loss, q_loss, acc


# --------------------------------------------------------------------- main --

def make_batch(key, idx_start):
    k1, k2, k3, k4, k5 = jax.random.split(key, 5)
    s1 = jax.random.normal(k1, (BATCH, SEQ, WORD_EMBED_DIM), jnp.float32)
    s2 = jax.random.normal(k2, (BATCH, SEQ, WORD_EMBED_DIM), jnp.float32)
    len1 = jax.random.randint(k3, (BATCH,), 1, SEQ + 1)
    len2 = jax.random.randint(k4, (BATCH,), 1, SEQ + 1)
    t = jnp.arange(SEQ)[None, :]
    m1 = (t < len1[:, None]).astype(jnp.float32)[:, :, None]
    m2 = (t < len2[:, None]).astype(jnp.float32)[:, :, None]
    s1 = s1 * m1   # collate_pad_snli zero-pads beyond each sentence length
    s2 = s2 * m2
    l1 = len1.astype(jnp.float32)[:, None]                    # (B, 1)
    l2 = len2.astype(jnp.float32)[:, None]
    labels = jax.random.randint(k5, (BATCH,), 0, N_CLASSES).astype(jnp.int32)
    idx = jnp.arange(idx_start, idx_start + BATCH, dtype=jnp.int32)
    return (s1, l1, s2, l2), labels, idx


if __name__ == "__main__":
    key = jax.random.PRNGKey(0)
    kp, kd1, kd2, ks = jax.random.split(key, 4)
    kw = jax.random.split(kp, 3)

    params = {
        'w_enc': 0.02 * jax.random.normal(kw[0], (WORD_EMBED_DIM, ENCODER_DIM),
                                          jnp.float32),
        'b_enc': jnp.zeros((ENCODER_DIM,), jnp.float32),
        'w1':    0.02 * jax.random.normal(kw[1], (4 * ENCODER_DIM, FC_DIM),
                                          jnp.float32),
        'b1':    jnp.zeros((FC_DIM,), jnp.float32),
        'w2':    0.02 * jax.random.normal(kw[2], (FC_DIM, N_CLASSES),
                                          jnp.float32),
        'b2':    jnp.zeros((N_CLASSES,), jnp.float32),
    }
    lambda_x = jnp.ones((TRAIN_SIZE,), jnp.float32)
    z_params = jax.tree_util.tree_map(jnp.zeros_like, params)
    state = {'G': init_saga_buf(PSHAPE), 'H': init_saga_buf(PSHAPE),
             'F': init_saga_buf(PSHAPE), 'J': init_saga_buf(LSHAPE)}

    train_batch = make_batch(kd1, 0)
    val_batch = make_batch(kd2, BATCH)

    # sanity: fused Pallas forward matches the pure-JAX mirror
    (s1, l1, s2, l2), labels, _ = train_batch
    logits_p, _, _ = fused_forward(params, s1, s2, l1, l2, labels,
                                   jnp.ones((BATCH,), jnp.float32))
    logits_j = predict_jax(params, (s1, l1, s2, l2))
    np.testing.assert_allclose(np.asarray(logits_p), np.asarray(logits_j),
                               atol=5e-3, rtol=5e-3)

    rand_slots = jax.random.randint(ks, (4,), 0, HIST_LEN, dtype=jnp.int32)
    step = jax.jit(learner_step)

    out = step(params, lambda_x, z_params, state, train_batch, val_batch,
               rand_slots)
    new_params, lam_new, z_new, state, inner_loss, q_loss, acc = out
    jax.block_until_ready(out)
    assert np.isfinite(float(inner_loss)) and np.isfinite(float(q_loss))

    # second step exercises the stateful history path (no recompilation)
    out2 = step(new_params, lam_new, z_new, state, train_batch, val_batch,
                rand_slots)
    jax.block_until_ready(out2)

    print("KERNEL_OK")
</pallas_src>

<mosaic_0001>
module attributes {stable_mosaic.version = 11 : i64} {
  func.func @fused_forward_kernel(%arg0: memref<8x16x384xf32, #tpu.memory_space<vmem>>, %arg1: memref<8x16x384xf32, #tpu.memory_space<vmem>>, %arg2: memref<16x1xf32, #tpu.memory_space<vmem>>, %arg3: memref<384x64xf32, #tpu.memory_space<vmem>>, %arg4: memref<1x64xf32, #tpu.memory_space<vmem>>, %arg5: memref<4x64x128xf32, #tpu.memory_space<vmem>>, %arg6: memref<1x128xf32, #tpu.memory_space<vmem>>, %arg7: memref<128x128xf32, #tpu.memory_space<vmem>>, %arg8: memref<1x128xf32, #tpu.memory_space<vmem>>, %arg9: memref<8x1xi32, #tpu.memory_space<vmem>>, %arg10: memref<8x1xf32, #tpu.memory_space<vmem>>, %arg11: memref<8x128xf32, #tpu.memory_space<vmem>>, %arg12: memref<1x1xf32, #tpu.memory_space<vmem>>, %arg13: memref<8x1xi32, #tpu.memory_space<vmem>>) attributes {dimension_semantics = [], scalar_prefetch = 0 : i64, scratch_operands = 0 : i64, tpu.core_type = #tpu.core_type<tc>} {
    %c0 = arith.constant 0 : index
    %c0_0 = arith.constant 0 : index
    %c0_1 = arith.constant 0 : index
    %0 = vector.load %arg0[%c0, %c0_0, %c0_1] : memref<8x16x384xf32, #tpu.memory_space<vmem>>, vector<8x16x384xf32>
    %cst = arith.constant dense<0.000000e+00> : vector<8x384xf32>
    %1 = vector.multi_reduction <add>, %0, %cst [1] : vector<8x16x384xf32> to vector<8x384xf32>
    %c0_2 = arith.constant 0 : index
    %c0_3 = arith.constant 0 : index
    %c0_4 = arith.constant 0 : index
    %2 = vector.load %arg1[%c0_2, %c0_3, %c0_4] : memref<8x16x384xf32, #tpu.memory_space<vmem>>, vector<8x16x384xf32>
    %cst_5 = arith.constant dense<0.000000e+00> : vector<8x384xf32>
    %3 = vector.multi_reduction <add>, %2, %cst_5 [1] : vector<8x16x384xf32> to vector<8x384xf32>
    %4 = tpu.concatenate %1, %3 in 0 : vector<8x384xf32>, vector<8x384xf32> -> vector<16x384xf32>
    %c0_6 = arith.constant 0 : index
    %c0_7 = arith.constant 0 : index
    %5 = vector.load %arg3[%c0_6, %c0_7] : memref<384x64xf32, #tpu.memory_space<vmem>>, vector<384x64xf32>
    %cst_8 = arith.constant dense<0.000000e+00> : vector<16x64xf32>
    %6 = tpu.matmul %4, %5, %cst_8 {dimension_numbers = #tpu.dot_dimension_numbers<[1], [0], [0], [1], [0, 0, 1, 1], [], []>} : vector<16x384xf32>, vector<384x64xf32>, vector<16x64xf32> -> vector<16x64xf32>
    %c0_9 = arith.constant 0 : index
    %c0_10 = arith.constant 0 : index
    %7 = vector.load %arg2[%c0_9, %c0_10] : memref<16x1xf32, #tpu.memory_space<vmem>>, vector<16x1xf32>
    %8 = tpu.reciprocal %7 {approx = true} : vector<16x1xf32> -> vector<16x1xf32>
    %9 = vector.broadcast %8 : vector<16x1xf32> to vector<16x64xf32>
    %10 = arith.mulf %6, %9 : vector<16x64xf32>
    %c0_11 = arith.constant 0 : index
    %c0_12 = arith.constant 0 : index
    %11 = vector.load %arg4[%c0_11, %c0_12] : memref<1x64xf32, #tpu.memory_space<vmem>>, vector<1x64xf32>
    %12 = vector.broadcast %11 : vector<1x64xf32> to vector<16x64xf32>
    %13 = arith.addf %10, %12 : vector<16x64xf32>
    %14 = vector.extract_strided_slice %13 {offsets = [0, 0], sizes = [8, 64], strides = [1, 1]} : vector<16x64xf32> to vector<8x64xf32>
    %15 = vector.extract_strided_slice %13 {offsets = [8, 0], sizes = [8, 64], strides = [1, 1]} : vector<16x64xf32> to vector<8x64xf32>
    %c0_13 = arith.constant 0 : index
    %c0_14 = arith.constant 0 : index
    %c0_15 = arith.constant 0 : index
    %16 = vector.load %arg5[%c0_13, %c0_14, %c0_15] : memref<4x64x128xf32, #tpu.memory_space<vmem>>, vector<1x64x128xf32>
    %17 = vector.shape_cast %16 : vector<1x64x128xf32> to vector<64x128xf32>
    %cst_16 = arith.constant dense<0.000000e+00> : vector<8x128xf32>
    %18 = tpu.matmul %14, %17, %cst_16 {dimension_numbers = #tpu.dot_dimension_numbers<[1], [0], [0], [1], [0, 0, 1, 1], [], []>} : vector<8x64xf32>, vector<64x128xf32>, vector<8x128xf32> -> vector<8x128xf32>
    %c1 = arith.constant 1 : index
    %c0_17 = arith.constant 0 : index
    %c0_18 = arith.constant 0 : index
    %19 = vector.load %arg5[%c1, %c0_17, %c0_18] : memref<4x64x128xf32, #tpu.memory_space<vmem>>, vector<1x64x128xf32>
    %20 = vector.shape_cast %19 : vector<1x64x128xf32> to vector<64x128xf32>
    %cst_19 = arith.constant dense<0.000000e+00> : vector<8x128xf32>
    %21 = tpu.matmul %15, %20, %cst_19 {dimension_numbers = #tpu.dot_dimension_numbers<[1], [0], [0], [1], [0, 0, 1, 1], [], []>} : vector<8x64xf32>, vector<64x128xf32>, vector<8x128xf32> -> vector<8x128xf32>
    %22 = arith.addf %18, %21 : vector<8x128xf32>
    %23 = arith.subf %14, %15 : vector<8x64xf32>
    %24 = math.absf %23 : vector<8x64xf32>
    %c2 = arith.constant 2 : index
    %c0_20 = arith.constant 0 : index
    %c0_21 = arith.constant 0 : index
    %25 = vector.load %arg5[%c2, %c0_20, %c0_21] : memref<4x64x128xf32, #tpu.memory_space<vmem>>, vector<1x64x128xf32>
    %26 = vector.shape_cast %25 : vector<1x64x128xf32> to vector<64x128xf32>
    %cst_22 = arith.constant dense<0.000000e+00> : vector<8x128xf32>
    %27 = tpu.matmul %24, %26, %cst_22 {dimension_numbers = #tpu.dot_dimension_numbers<[1], [0], [0], [1], [0, 0, 1, 1], [], []>} : vector<8x64xf32>, vector<64x128xf32>, vector<8x128xf32> -> vector<8x128xf32>
    %28 = arith.addf %22, %27 : vector<8x128xf32>
    %29 = arith.mulf %14, %15 : vector<8x64xf32>
    %c3 = arith.constant 3 : index
    %c0_23 = arith.constant 0 : index
    %c0_24 = arith.constant 0 : index
    %30 = vector.load %arg5[%c3, %c0_23, %c0_24] : memref<4x64x128xf32, #tpu.memory_space<vmem>>, vector<1x64x128xf32>
    %31 = vector.shape_cast %30 : vector<1x64x128xf32> to vector<64x128xf32>
    %cst_25 = arith.constant dense<0.000000e+00> : vector<8x128xf32>
    %32 = tpu.matmul %29, %31, %cst_25 {dimension_numbers = #tpu.dot_dimension_numbers<[1], [0], [0], [1], [0, 0, 1, 1], [], []>} : vector<8x64xf32>, vector<64x128xf32>, vector<8x128xf32> -> vector<8x128xf32>
    %33 = arith.addf %28, %32 : vector<8x128xf32>
    %c0_26 = arith.constant 0 : index
    %c0_27 = arith.constant 0 : index
    %34 = vector.load %arg6[%c0_26, %c0_27] : memref<1x128xf32, #tpu.memory_space<vmem>>, vector<1x128xf32>
    %35 = vector.broadcast %34 : vector<1x128xf32> to vector<8x128xf32>
    %36 = arith.addf %33, %35 : vector<8x128xf32>
    %cst_28 = arith.constant 0.000000e+00 : f32
    %37 = vector.broadcast %cst_28 : f32 to vector<8x128xf32>
    %38 = arith.maximumf %36, %37 : vector<8x128xf32>
    %c0_29 = arith.constant 0 : index
    %c0_30 = arith.constant 0 : index
    %39 = vector.load %arg7[%c0_29, %c0_30] : memref<128x128xf32, #tpu.memory_space<vmem>>, vector<128x128xf32>
    %cst_31 = arith.constant dense<0.000000e+00> : vector<8x128xf32>
    %40 = tpu.matmul %38, %39, %cst_31 {dimension_numbers = #tpu.dot_dimension_numbers<[1], [0], [0], [1], [0, 0, 1, 1], [], []>} : vector<8x128xf32>, vector<128x128xf32>, vector<8x128xf32> -> vector<8x128xf32>
    %c0_32 = arith.constant 0 : index
    %c0_33 = arith.constant 0 : index
    %41 = vector.load %arg8[%c0_32, %c0_33] : memref<1x128xf32, #tpu.memory_space<vmem>>, vector<1x128xf32>
    %42 = vector.broadcast %41 : vector<1x128xf32> to vector<8x128xf32>
    %43 = arith.addf %40, %42 : vector<8x128xf32>
    %c0_34 = arith.constant 0 : index
    %c0_35 = arith.constant 0 : index
    %44 = vector.load %arg11[%c0_34, %c0_35] : memref<8x128xf32, #tpu.memory_space<vmem>>, vector<8x128xf32>
    tpu.vector_store %arg11[%c0_34, %c0_35], %43 {strides = array<i32>} : memref<8x128xf32, #tpu.memory_space<vmem>>, vector<8x128xf32>,
    %cst_36 = arith.constant dense<0xFF800000> : vector<8xf32>
    %45 = vector.multi_reduction <maximumf>, %43, %cst_36 [1] : vector<8x128xf32> to vector<8xf32>
    %46 = vector.shape_cast %45 : vector<8xf32> to vector<8x1xf32>
    %47 = vector.broadcast %46 : vector<8x1xf32> to vector<8x128xf32>
    %48 = arith.subf %43, %47 : vector<8x128xf32>
    %49 = math.exp %48 : vector<8x128xf32>
    %cst_37 = arith.constant dense<0.000000e+00> : vector<8xf32>
    %50 = vector.multi_reduction <add>, %49, %cst_37 [1] : vector<8x128xf32> to vector<8xf32>
    %51 = vector.shape_cast %50 : vector<8xf32> to vector<8x1xf32>
    %52 = math.log %51 : vector<8x1xf32>
    %53 = arith.addf %46, %52 : vector<8x1xf32>
    %54 = tpu.iota {dimensions = array<i32: 1>} : vector<8x128xi32>
    %c0_38 = arith.constant 0 : index
    %c0_39 = arith.constant 0 : index
    %55 = vector.load %arg9[%c0_38, %c0_39] : memref<8x1xi32, #tpu.memory_space<vmem>>, vector<8x1xi32>
    %56 = vector.broadcast %55 : vector<8x1xi32> to vector<8x128xi32>
    %57 = arith.cmpi eq, %54, %56 : vector<8x128xi32>
    %58 = arith.extui %57 : vector<8x128xi1> to vector<8x128xi32>
    %59 = arith.sitofp %58 : vector<8x128xi32> to vector<8x128xf32>
    %60 = arith.mulf %59, %43 : vector<8x128xf32>
    %cst_40 = arith.constant dense<0.000000e+00> : vector<8xf32>
    %61 = vector.multi_reduction <add>, %60, %cst_40 [1] : vector<8x128xf32> to vector<8xf32>
    %62 = vector.shape_cast %61 : vector<8xf32> to vector<8x1xf32>
    %63 = arith.subf %53, %62 : vector<8x1xf32>
    %c0_41 = arith.constant 0 : index
    %c0_42 = arith.constant 0 : index
    %64 = vector.load %arg10[%c0_41, %c0_42] : memref<8x1xf32, #tpu.memory_space<vmem>>, vector<8x1xf32>
    %65 = arith.mulf %64, %63 : vector<8x1xf32>
    %66 = vector.shape_cast %65 : vector<8x1xf32> to vector<1x8x1xf32>
    %cst_43 = arith.constant dense<0.000000e+00> : vector<1xf32>
    %67 = vector.multi_reduction <add>, %66, %cst_43 [1, 2] : vector<1x8x1xf32> to vector<1xf32>
    %68 = vector.shape_cast %67 : vector<1xf32> to vector<1x1x1xf32>
    %69 = vector.extract %68[0, 0, 0] : f32 from vector<1x1x1xf32>
    %cst_44 = arith.constant 8.000000e+00 : f32
    %70 = arith.divf %69, %cst_44 : f32
    %cst_45 = arith.constant 1.000000e+00 : f32
    %71 = vector.broadcast %cst_45 : f32 to vector<1x1xf32>
    %72 = vector.broadcast %70 : f32 to vector<1x1xf32>
    %73 = arith.mulf %72, %71 : vector<1x1xf32>
    %c0_46 = arith.constant 0 : index
    %c0_47 = arith.constant 0 : index
    %74 = vector.load %arg12[%c0_46, %c0_47] : memref<1x1xf32, #tpu.memory_space<vmem>>, vector<1x1xf32>
    tpu.vector_store %arg12[%c0_46, %c0_47], %73 {strides = array<i32>} : memref<1x1xf32, #tpu.memory_space<vmem>>, vector<1x1xf32>,
    %75 = vector.broadcast %46 : vector<8x1xf32> to vector<8x128xf32>
    %76 = arith.cmpf oge, %43, %75 : vector<8x128xf32>
    %c128_i32 = arith.constant 128 : i32
    %77 = vector.broadcast %c128_i32 : i32 to vector<8x128xi32>
    %78 = arith.select %76, %54, %77 : vector<8x128xi1>, vector<8x128xi32>
    %cst_48 = arith.constant dense<2147483647> : vector<8xi32>
    %79 = vector.multi_reduction <minsi>, %78, %cst_48 [1] : vector<8x128xi32> to vector<8xi32>
    %80 = vector.shape_cast %79 : vector<8xi32> to vector<8x1xi32>
    %c0_49 = arith.constant 0 : index
    %c0_50 = arith.constant 0 : index
    %81 = vector.load %arg13[%c0_49, %c0_50] : memref<8x1xi32, #tpu.memory_space<vmem>>, vector<8x1xi32>
    tpu.vector_store %arg13[%c0_49, %c0_50], %80 {strides = array<i32>} : memref<8x1xi32, #tpu.memory_space<vmem>>, vector<8x1xi32>,
    return
  }
}

</mosaic_0001>

<llo_original>
// kernel: tpu_custom_call.1
$region0: #{tpu_custom_call.1}
  #allocation0 [shape = 'u32[]', space=smem, size = 0x4, offset = 0x4, fixed_abs, tag = 'smem constant byte address 0x4 - core index']
  #allocation1 [shape = 'u32[144,128]{1,0:T(1,128)}', space=vmem, size = 0x12000, scoped, tag = 'internal scratch']
  %s0 = inlined_call_operand.vmem [shape: f32[8,16,384], index: 0, kind: input, shape index: {}]
  %s1 = inlined_call_operand.hbm [shape: f32[8,16,384], index: 1, kind: input, shape index: {}]
  %s2 = inlined_call_operand.vmem [shape: f32[16,1], index: 2, kind: input, shape index: {}]
  %s3 = inlined_call_operand.vmem [shape: f32[384,64], index: 3, kind: input, shape index: {}]
  %s4 = inlined_call_operand.vmem [shape: f32[1,64], index: 4, kind: input, shape index: {}]
  %s5 = inlined_call_operand.hbm [shape: f32[4,64,128], index: 5, kind: input, shape index: {}]
  %s6 = inlined_call_operand.vmem [shape: f32[1,128], index: 6, kind: input, shape index: {}]
  %s7 = inlined_call_operand.vmem [shape: f32[128,128], index: 7, kind: input, shape index: {}]
  %s8 = inlined_call_operand.vmem [shape: f32[1,128], index: 8, kind: input, shape index: {}]
  %s9 = inlined_call_operand.vmem [shape: s32[8,1], index: 9, kind: input, shape index: {}]
  %s10 = inlined_call_operand.vmem [shape: f32[8,1], index: 10, kind: input, shape index: {}]
  %s11 = inlined_call_operand.hbm [shape: f32[8,128], index: 11, kind: output, shape index: {0}]
  %s12 = inlined_call_operand.hbm [shape: f32[1,1], index: 12, kind: output, shape index: {1}]
  %s13 = inlined_call_operand.vmem [shape: s32[8,1], index: 13, kind: output, shape index: {2}]
  %14 = xla_tuple %s11, %s12, %s13
  %s15 = sld [smem:[#allocation0]]
  $region78: #{tpu_custom_call.1} parent=0
    _
  %s17 = ssub.s32 1, %s15
  %s18 = scalar_select 0, %s17, %s15
  $region1: #{tpu_custom_call.1} parent=0
    #allocation2 [shape = 'u8[196608]{0}', space=vmem, size = 0x30000, scoped, tag = 'input window, operand 1, single buffered']
    #allocation3 [shape = 's32[1]{0}', space=sflag, size = 0x4, scoped, tag = 'scoped memory for tpu_custom_call.1']
    #allocation4 [shape = 's32[1]{0}', space=sflag, size = 0x4, scoped, tag = 'scoped memory for tpu_custom_call.1']
    #allocation5 [shape = 'u8[131072]{0}', space=vmem, size = 0x20000, scoped, tag = 'input window, operand 5, single buffered']
    #allocation6 [shape = 's32[1]{0}', space=sflag, size = 0x4, scoped, tag = 'scoped memory for tpu_custom_call.1']
    #allocation7 [shape = 'u8[4096]{0}', space=vmem, size = 0x1000, scoped, tag = 'output window, operand 0, single buffered']
    #allocation8 [shape = 'u8[512]{0}', space=vmem, size = 0x400, scoped, tag = 'output window, operand 1, single buffered']
    #allocation9 [shape = 's32[1]{0}', space=sflag, size = 0x4, scoped, tag = 'scoped memory for tpu_custom_call.1']
    %19 = vsyncpa [#allocation3], 0
    %20 = vsyncpa [#allocation6], 0
    %21 = vsyncpa [#allocation4], 0
    %22 = vsyncpa [#allocation9], 0
    // Predicated region
    $region2: #{tpu_custom_call.1} parent=1 // pred_check
      _
    $region3: #{tpu_custom_call.1} parent=1 // pred_check_branch
      %24 = sbr.rel (0) target = $region5
    $region4: #{tpu_custom_call.1} parent=1 // pred_region
      _
    $region5: #{tpu_custom_call.1} parent=1 // pred_fallthru
      _
    // Predicated region
    $region6: #{tpu_custom_call.1} parent=1 // pred_check
      _
    $region7: #{tpu_custom_call.1} parent=1 // pred_check_branch
      %26 = sbr.rel (0) target = $region9
    $region8: #{tpu_custom_call.1} parent=1 // pred_region
      %s28 = ssub.s32 6144, 6144
      %29 = vsyncadd [#allocation3], %s28
      %s30 = sshll.u32 [#allocation2], 4
      %s31 = int_to_ptr.vmem [resolvable:$true] %s30
      %36 = dma.hbm_to_vmem [thread:$0]  %s1, 6144, %s31, [#allocation3], 384, 384, 24
    $region9: #{tpu_custom_call.1} parent=1 // pred_fallthru
      _
    // Predicated region
    $region10: #{tpu_custom_call.1} parent=1 // pred_check
      _
    $region11: #{tpu_custom_call.1} parent=1 // pred_check_branch
      %38 = sbr.rel (0) target = $region13
    $region12: #{tpu_custom_call.1} parent=1 // pred_region
      _
    $region13: #{tpu_custom_call.1} parent=1 // pred_fallthru
      _
    // Predicated region
    $region14: #{tpu_custom_call.1} parent=1 // pred_check
      _
    $region15: #{tpu_custom_call.1} parent=1 // pred_check_branch
      %40 = sbr.rel (0) target = $region17
    $region16: #{tpu_custom_call.1} parent=1 // pred_region
      _
    $region17: #{tpu_custom_call.1} parent=1 // pred_fallthru
      _
    // Predicated region
    $region18: #{tpu_custom_call.1} parent=1 // pred_check
      _
    $region19: #{tpu_custom_call.1} parent=1 // pred_check_branch
      %42 = sbr.rel (0) target = $region21
    $region20: #{tpu_custom_call.1} parent=1 // pred_region
      _
    $region21: #{tpu_custom_call.1} parent=1 // pred_fallthru
      _
    // Predicated region
    $region22: #{tpu_custom_call.1} parent=1 // pred_check
      _
    $region23: #{tpu_custom_call.1} parent=1 // pred_check_branch
      %44 = sbr.rel (0) target = $region25
    $region24: #{tpu_custom_call.1} parent=1 // pred_region
      %s46 = ssub.s32 4096, 4096
      %47 = vsyncadd [#allocation6], %s46
      %s48 = sshll.u32 [#allocation5], 4
      %s49 = int_to_ptr.vmem [resolvable:$true] %s48
      %54 = dma.hbm_to_vmem [thread:$0]  %s5, 4096, %s49, [#allocation6], 128, 128, 8
    $region25: #{tpu_custom_call.1} parent=1 // pred_fallthru
      _
    // Predicated region
    $region26: #{tpu_custom_call.1} parent=1 // pred_check
      _
    $region27: #{tpu_custom_call.1} parent=1 // pred_check_branch
      %56 = sbr.rel (0) target = $region29
    $region28: #{tpu_custom_call.1} parent=1 // pred_region
      _
    $region29: #{tpu_custom_call.1} parent=1 // pred_fallthru
      _
    // Predicated region
    $region30: #{tpu_custom_call.1} parent=1 // pred_check
      _
    $region31: #{tpu_custom_call.1} parent=1 // pred_check_branch
      %58 = sbr.rel (0) target = $region33
    $region32: #{tpu_custom_call.1} parent=1 // pred_region
      _
    $region33: #{tpu_custom_call.1} parent=1 // pred_fallthru
      _
    // Predicated region
    $region34: #{tpu_custom_call.1} parent=1 // pred_check
      _
    $region35: #{tpu_custom_call.1} parent=1 // pred_check_branch
      %60 = sbr.rel (0) target = $region37
    $region36: #{tpu_custom_call.1} parent=1 // pred_region
      _
    $region37: #{tpu_custom_call.1} parent=1 // pred_fallthru
      _
    // Predicated region
    $region38: #{tpu_custom_call.1} parent=1 // pred_check
      _
    $region39: #{tpu_custom_call.1} parent=1 // pred_check_branch
      %62 = sbr.rel (0) target = $region41
    $region40: #{tpu_custom_call.1} parent=1 // pred_region
      _
    $region41: #{tpu_custom_call.1} parent=1 // pred_fallthru
      _
    // Predicated region
    $region42: #{tpu_custom_call.1} parent=1 // pred_check
      _
    $region43: #{tpu_custom_call.1} parent=1 // pred_check_branch
      %64 = sbr.rel (0) target = $region45
    $region44: #{tpu_custom_call.1} parent=1 // pred_region
      _
    $region45: #{tpu_custom_call.1} parent=1 // pred_fallthru
      _
    // Predicated region
    $region46: #{tpu_custom_call.1} parent=1 // pred_check
      _
    $region47: #{tpu_custom_call.1} parent=1 // pred_check_branch
      %66 = sbr.rel (0) target = $region49
    $region48: #{tpu_custom_call.1} parent=1 // pred_region
      %67 = dma.done [#allocation3], 6144
    $region49: #{tpu_custom_call.1} parent=1 // pred_fallthru
      _
    // Predicated region
    $region50: #{tpu_custom_call.1} parent=1 // pred_check
      _
    $region51: #{tpu_custom_call.1} parent=1 // pred_check_branch
      %69 = sbr.rel (0) target = $region53
    $region52: #{tpu_custom_call.1} parent=1 // pred_region
      %70 = dma.done [#allocation6], 4096
    $region53: #{tpu_custom_call.1} parent=1 // pred_fallthru
      _
    %v71 = vld [vmem:[%s0] sm:$0xff]
    %v72 = vld [vmem:[%s0 + $0x8] sm:$0xff]
    %v73 = vld [vmem:[%s0 + $0x10] sm:$0xff]
    %v74 = vld [vmem:[%s0 + $0x18] sm:$0xff]
    %v75 = vld [vmem:[%s0 + $0x20] sm:$0xff]
    %v76 = vld [vmem:[%s0 + $0x28] sm:$0xff]
    %v77 = vld [vmem:[%s0 + $0x30] sm:$0xff]
    %v78 = vld [vmem:[%s0 + $0x38] sm:$0xff]
    %v79 = vld [vmem:[%s0 + $0x40] sm:$0xff]
    %v80 = vld [vmem:[%s0 + $0x48] sm:$0xff]
    %v81 = vld [vmem:[%s0 + $0x50] sm:$0xff]
    %v82 = vld [vmem:[%s0 + $0x58] sm:$0xff]
    %v83 = vld [vmem:[%s0 + $0x60] sm:$0xff]
    %v84 = vld [vmem:[%s0 + $0x68] sm:$0xff]
    %v85 = vld [vmem:[%s0 + $0x70] sm:$0xff]
    %v86 = vld [vmem:[%s0 + $0x78] sm:$0xff]
    %v87 = vld [vmem:[%s0 + $0x80] sm:$0xff]
    %v88 = vld [vmem:[%s0 + $0x88] sm:$0xff]
    %v89 = vld [vmem:[%s0 + $0x90] sm:$0xff]
    %v90 = vld [vmem:[%s0 + $0x98] sm:$0xff]
    %v91 = vld [vmem:[%s0 + $0xa0] sm:$0xff]
    %v92 = vld [vmem:[%s0 + $0xa8] sm:$0xff]
    %v93 = vld [vmem:[%s0 + $0xb0] sm:$0xff]
    %v94 = vld [vmem:[%s0 + $0xb8] sm:$0xff]
    %v95 = vld [vmem:[%s0 + $0xc0] sm:$0xff]
    %v96 = vld [vmem:[%s0 + $0xc8] sm:$0xff]
    %v97 = vld [vmem:[%s0 + $0xd0] sm:$0xff]
    %v98 = vld [vmem:[%s0 + $0xd8] sm:$0xff]
    %v99 = vld [vmem:[%s0 + $0xe0] sm:$0xff]
    %v100 = vld [vmem:[%s0 + $0xe8] sm:$0xff]
    %v101 = vld [vmem:[%s0 + $0xf0] sm:$0xff]
    %v102 = vld [vmem:[%s0 + $0xf8] sm:$0xff]
    %v103 = vld [vmem:[%s0 + $0x100] sm:$0xff]
    %v104 = vld [vmem:[%s0 + $0x108] sm:$0xff]
    %v105 = vld [vmem:[%s0 + $0x110] sm:$0xff]
    %v106 = vld [vmem:[%s0 + $0x118] sm:$0xff]
    %v107 = vld [vmem:[%s0 + $0x120] sm:$0xff]
    %v108 = vld [vmem:[%s0 + $0x128] sm:$0xff]
    %v109 = vld [vmem:[%s0 + $0x130] sm:$0xff]
    %v110 = vld [vmem:[%s0 + $0x138] sm:$0xff]
    %v111 = vld [vmem:[%s0 + $0x140] sm:$0xff]
    %v112 = vld [vmem:[%s0 + $0x148] sm:$0xff]
    %v113 = vld [vmem:[%s0 + $0x150] sm:$0xff]
    %v114 = vld [vmem:[%s0 + $0x158] sm:$0xff]
    %v115 = vld [vmem:[%s0 + $0x160] sm:$0xff]
    %v116 = vld [vmem:[%s0 + $0x168] sm:$0xff]
    %v117 = vld [vmem:[%s0 + $0x170] sm:$0xff]
    %v118 = vld [vmem:[%s0 + $0x178] sm:$0xff]
    %v119 = vadd.f32 %v71, %v74
    %v120 = vrot.slane %v119, 4
    %v121 = vadd.f32 %v119, %v120
    %v122 = vrot.slane %v121, 2
    %v123 = vadd.f32 %v121, %v122
    %v124 = vrot.slane %v123, 1
    %v125 = vadd.f32 %v123, %v124
    %v126 = vadd.f32 %v72, %v75
    %v127 = vrot.slane %v126, 4
    %v128 = vadd.f32 %v126, %v127
    %v129 = vrot.slane %v128, 2
    %v130 = vadd.f32 %v128, %v129
    %v131 = vrot.slane %v130, 1
    %v132 = vadd.f32 %v130, %v131
    %v133 = vadd.f32 %v73, %v76
    %v134 = vrot.slane %v133, 4
    %v135 = vadd.f32 %v133, %v134
    %v136 = vrot.slane %v135, 2
    %v137 = vadd.f32 %v135, %v136
    %v138 = vrot.slane %v137, 1
    %v139 = vadd.f32 %v137, %v138
    %v140 = vadd.f32 %v77, %v80
    %v141 = vrot.slane %v140, 4
    %v142 = vadd.f32 %v140, %v141
    %v143 = vrot.slane %v142, 2
    %v144 = vadd.f32 %v142, %v143
    %v145 = vrot.slane %v144, 1
    %v146 = vadd.f32 %v144, %v145
    %v147 = vadd.f32 %v78, %v81
    %v148 = vrot.slane %v147, 4
    %v149 = vadd.f32 %v147, %v148
    %v150 = vrot.slane %v149, 2
    %v151 = vadd.f32 %v149, %v150
    %v152 = vrot.slane %v151, 1
    %v153 = vadd.f32 %v151, %v152
    %v154 = vadd.f32 %v79, %v82
    %v155 = vrot.slane %v154, 4
    %v156 = vadd.f32 %v154, %v155
    %v157 = vrot.slane %v156, 2
    %v158 = vadd.f32 %v156, %v157
    %v159 = vrot.slane %v158, 1
    %v160 = vadd.f32 %v158, %v159
    %v161 = vadd.f32 %v83, %v86
    %v162 = vrot.slane %v161, 4
    %v163 = vadd.f32 %v161, %v162
    %v164 = vrot.slane %v163, 2
    %v165 = vadd.f32 %v163, %v164
    %v166 = vrot.slane %v165, 1
    %v167 = vadd.f32 %v165, %v166
    %v168 = vadd.f32 %v84, %v87
    %v169 = vrot.slane %v168, 4
    %v170 = vadd.f32 %v168, %v169
    %v171 = vrot.slane %v170, 2
    %v172 = vadd.f32 %v170, %v171
    %v173 = vrot.slane %v172, 1
    %v174 = vadd.f32 %v172, %v173
    %v175 = vadd.f32 %v85, %v88
    %v176 = vrot.slane %v175, 4
    %v177 = vadd.f32 %v175, %v176
    %v178 = vrot.slane %v177, 2
    %v179 = vadd.f32 %v177, %v178
    %v180 = vrot.slane %v179, 1
    %v181 = vadd.f32 %v179, %v180
    %v182 = vadd.f32 %v89, %v92
    %v183 = vrot.slane %v182, 4
    %v184 = vadd.f32 %v182, %v183
    %v185 = vrot.slane %v184, 2
    %v186 = vadd.f32 %v184, %v185
    %v187 = vrot.slane %v186, 1
    %v188 = vadd.f32 %v186, %v187
    %v189 = vadd.f32 %v90, %v93
    %v190 = vrot.slane %v189, 4
    %v191 = vadd.f32 %v189, %v190
    %v192 = vrot.slane %v191, 2
    %v193 = vadd.f32 %v191, %v192
    %v194 = vrot.slane %v193, 1
    %v195 = vadd.f32 %v193, %v194
    %v196 = vadd.f32 %v91, %v94
    %v197 = vrot.slane %v196, 4
    %v198 = vadd.f32 %v196, %v197
    %v199 = vrot.slane %v198, 2
    %v200 = vadd.f32 %v198, %v199
    %v201 = vrot.slane %v200, 1
    %v202 = vadd.f32 %v200, %v201
    %v203 = vadd.f32 %v95, %v98
    %v204 = vrot.slane %v203, 4
    %v205 = vadd.f32 %v203, %v204
    %v206 = vrot.slane %v205, 2
    %v207 = vadd.f32 %v205, %v206
    %v208 = vrot.slane %v207, 1
    %v209 = vadd.f32 %v207, %v208
    %v210 = vadd.f32 %v96, %v99
    %v211 = vrot.slane %v210, 4
    %v212 = vadd.f32 %v210, %v211
    %v213 = vrot.slane %v212, 2
    %v214 = vadd.f32 %v212, %v213
    %v215 = vrot.slane %v214, 1
    %v216 = vadd.f32 %v214, %v215
    %v217 = vadd.f32 %v97, %v100
    %v218 = vrot.slane %v217, 4
    %v219 = vadd.f32 %v217, %v218
    %v220 = vrot.slane %v219, 2
    %v221 = vadd.f32 %v219, %v220
    %v222 = vrot.slane %v221, 1
    %v223 = vadd.f32 %v221, %v222
    %v224 = vadd.f32 %v101, %v104
    %v225 = vrot.slane %v224, 4
    %v226 = vadd.f32 %v224, %v225
    %v227 = vrot.slane %v226, 2
    %v228 = vadd.f32 %v226, %v227
    %v229 = vrot.slane %v228, 1
    %v230 = vadd.f32 %v228, %v229
    %v231 = vadd.f32 %v102, %v105
    %v232 = vrot.slane %v231, 4
    %v233 = vadd.f32 %v231, %v232
    %v234 = vrot.slane %v233, 2
    %v235 = vadd.f32 %v233, %v234
    %v236 = vrot.slane %v235, 1
    %v237 = vadd.f32 %v235, %v236
    %v238 = vadd.f32 %v103, %v106
    %v239 = vrot.slane %v238, 4
    %v240 = vadd.f32 %v238, %v239
    %v241 = vrot.slane %v240, 2
    %v242 = vadd.f32 %v240, %v241
    %v243 = vrot.slane %v242, 1
    %v244 = vadd.f32 %v242, %v243
    %v245 = vadd.f32 %v107, %v110
    %v246 = vrot.slane %v245, 4
    %v247 = vadd.f32 %v245, %v246
    %v248 = vrot.slane %v247, 2
    %v249 = vadd.f32 %v247, %v248
    %v250 = vrot.slane %v249, 1
    %v251 = vadd.f32 %v249, %v250
    %v252 = vadd.f32 %v108, %v111
    %v253 = vrot.slane %v252, 4
    %v254 = vadd.f32 %v252, %v253
    %v255 = vrot.slane %v254, 2
    %v256 = vadd.f32 %v254, %v255
    %v257 = vrot.slane %v256, 1
    %v258 = vadd.f32 %v256, %v257
    %v259 = vadd.f32 %v109, %v112
    %v260 = vrot.slane %v259, 4
    %v261 = vadd.f32 %v259, %v260
    %v262 = vrot.slane %v261, 2
    %v263 = vadd.f32 %v261, %v262
    %v264 = vrot.slane %v263, 1
    %v265 = vadd.f32 %v263, %v264
    %v266 = vadd.f32 %v113, %v116
    %v267 = vrot.slane %v266, 4
    %v268 = vadd.f32 %v266, %v267
    %v269 = vrot.slane %v268, 2
    %v270 = vadd.f32 %v268, %v269
    %v271 = vrot.slane %v270, 1
    %v272 = vadd.f32 %v270, %v271
    %v273 = vadd.f32 %v114, %v117
    %v274 = vrot.slane %v273, 4
    %v275 = vadd.f32 %v273, %v274
    %v276 = vrot.slane %v275, 2
    %v277 = vadd.f32 %v275, %v276
    %v278 = vrot.slane %v277, 1
    %v279 = vadd.f32 %v277, %v278
    %v280 = vadd.f32 %v115, %v118
    %v281 = vrot.slane %v280, 4
    %v282 = vadd.f32 %v280, %v281
    %v283 = vrot.slane %v282, 2
    %v284 = vadd.f32 %v282, %v283
    %v285 = vrot.slane %v284, 1
    %v286 = vadd.f32 %v284, %v285
    %v287 = vld [vmem:[#allocation2] sm:$0xff]
    %v288 = vld [vmem:[#allocation2 + $0x8] sm:$0xff]
    %v289 = vld [vmem:[#allocation2 + $0x10] sm:$0xff]
    %v290 = vld [vmem:[#allocation2 + $0x18] sm:$0xff]
    %v291 = vld [vmem:[#allocation2 + $0x20] sm:$0xff]
    %v292 = vld [vmem:[#allocation2 + $0x28] sm:$0xff]
    %v293 = vld [vmem:[#allocation2 + $0x30] sm:$0xff]
    %v294 = vld [vmem:[#allocation2 + $0x38] sm:$0xff]
    %v295 = vld [vmem:[#allocation2 + $0x40] sm:$0xff]
    %v296 = vld [vmem:[#allocation2 + $0x48] sm:$0xff]
    %v297 = vld [vmem:[#allocation2 + $0x50] sm:$0xff]
    %v298 = vld [vmem:[#allocation2 + $0x58] sm:$0xff]
    %v299 = vld [vmem:[#allocation2 + $0x60] sm:$0xff]
    %v300 = vld [vmem:[#allocation2 + $0x68] sm:$0xff]
    %v301 = vld [vmem:[#allocation2 + $0x70] sm:$0xff]
    %v302 = vld [vmem:[#allocation2 + $0x78] sm:$0xff]
    %v303 = vld [vmem:[#allocation2 + $0x80] sm:$0xff]
    %v304 = vld [vmem:[#allocation2 + $0x88] sm:$0xff]
    %v305 = vld [vmem:[#allocation2 + $0x90] sm:$0xff]
    %v306 = vld [vmem:[#allocation2 + $0x98] sm:$0xff]
    %v307 = vld [vmem:[#allocation2 + $0xa0] sm:$0xff]
    %v308 = vld [vmem:[#allocation2 + $0xa8] sm:$0xff]
    %v309 = vld [vmem:[#allocation2 + $0xb0] sm:$0xff]
    %v310 = vld [vmem:[#allocation2 + $0xb8] sm:$0xff]
    %v311 = vld [vmem:[#allocation2 + $0xc0] sm:$0xff]
    %v312 = vld [vmem:[#allocation2 + $0xc8] sm:$0xff]
    %v313 = vld [vmem:[#allocation2 + $0xd0] sm:$0xff]
    %v314 = vld [vmem:[#allocation2 + $0xd8] sm:$0xff]
    %v315 = vld [vmem:[#allocation2 + $0xe0] sm:$0xff]
    %v316 = vld [vmem:[#allocation2 + $0xe8] sm:$0xff]
    %v317 = vld [vmem:[#allocation2 + $0xf0] sm:$0xff]
    %v318 = vld [vmem:[#allocation2 + $0xf8] sm:$0xff]
    %v319 = vld [vmem:[#allocation2 + $0x100] sm:$0xff]
    %v320 = vld [vmem:[#allocation2 + $0x108] sm:$0xff]
    %v321 = vld [vmem:[#allocation2 + $0x110] sm:$0xff]
    %v322 = vld [vmem:[#allocation2 + $0x118] sm:$0xff]
    %v323 = vld [vmem:[#allocation2 + $0x120] sm:$0xff]
    %v324 = vld [vmem:[#allocation2 + $0x128] sm:$0xff]
    %v325 = vld [vmem:[#allocation2 + $0x130] sm:$0xff]
    %v326 = vld [vmem:[#allocation2 + $0x138] sm:$0xff]
    %v327 = vld [vmem:[#allocation2 + $0x140] sm:$0xff]
    %v328 = vld [vmem:[#allocation2 + $0x148] sm:$0xff]
    %v329 = vld [vmem:[#allocation2 + $0x150] sm:$0xff]
    %v330 = vld [vmem:[#allocation2 + $0x158] sm:$0xff]
    %v331 = vld [vmem:[#allocation2 + $0x160] sm:$0xff]
    %v332 = vld [vmem:[#allocation2 + $0x168] sm:$0xff]
    %v333 = vld [vmem:[#allocation2 + $0x170] sm:$0xff]
    %v334 = vld [vmem:[#allocation2 + $0x178] sm:$0xff]
    %v335 = vadd.f32 %v287, %v290
    %v336 = vrot.slane %v335, 4
    %v337 = vadd.f32 %v335, %v336
    %v338 = vrot.slane %v337, 2
    %v339 = vadd.f32 %v337, %v338
    %v340 = vrot.slane %v339, 1
    %v341 = vadd.f32 %v339, %v340
    %v342 = vadd.f32 %v288, %v291
    %v343 = vrot.slane %v342, 4
    %v344 = vadd.f32 %v342, %v343
    %v345 = vrot.slane %v344, 2
    %v346 = vadd.f32 %v344, %v345
    %v347 = vrot.slane %v346, 1
    %v348 = vadd.f32 %v346, %v347
    %v349 = vadd.f32 %v289, %v292
    %v350 = vrot.slane %v349, 4
    %v351 = vadd.f32 %v349, %v350
    %v352 = vrot.slane %v351, 2
    %v353 = vadd.f32 %v351, %v352
    %v354 = vrot.slane %v353, 1
    %v355 = vadd.f32 %v353, %v354
    %v356 = vadd.f32 %v293, %v296
    %v357 = vrot.slane %v356, 4
    %v358 = vadd.f32 %v356, %v357
    %v359 = vrot.slane %v358, 2
    %v360 = vadd.f32 %v358, %v359
    %v361 = vrot.slane %v360, 1
    %v362 = vadd.f32 %v360, %v361
    %v363 = vadd.f32 %v294, %v297
    %v364 = vrot.slane %v363, 4
    %v365 = vadd.f32 %v363, %v364
    %v366 = vrot.slane %v365, 2
    %v367 = vadd.f32 %v365, %v366
    %v368 = vrot.slane %v367, 1
    %v369 = vadd.f32 %v367, %v368
    %v370 = vadd.f32 %v295, %v298
    %v371 = vrot.slane %v370, 4
    %v372 = vadd.f32 %v370, %v371
    %v373 = vrot.slane %v372, 2
    %v374 = vadd.f32 %v372, %v373
    %v375 = vrot.slane %v374, 1
    %v376 = vadd.f32 %v374, %v375
    %v377 = vadd.f32 %v299, %v302
    %v378 = vrot.slane %v377, 4
    %v379 = vadd.f32 %v377, %v378
    %v380 = vrot.slane %v379, 2
    %v381 = vadd.f32 %v379, %v380
    %v382 = vrot.slane %v381, 1
    %v383 = vadd.f32 %v381, %v382
    %v384 = vadd.f32 %v300, %v303
    %v385 = vrot.slane %v384, 4
    %v386 = vadd.f32 %v384, %v385
    %v387 = vrot.slane %v386, 2
    %v388 = vadd.f32 %v386, %v387
    %v389 = vrot.slane %v388, 1
    %v390 = vadd.f32 %v388, %v389
    %v391 = vadd.f32 %v301, %v304
    %v392 = vrot.slane %v391, 4
    %v393 = vadd.f32 %v391, %v392
    %v394 = vrot.slane %v393, 2
    %v395 = vadd.f32 %v393, %v394
    %v396 = vrot.slane %v395, 1
    %v397 = vadd.f32 %v395, %v396
    %v398 = vadd.f32 %v305, %v308
    %v399 = vrot.slane %v398, 4
    %v400 = vadd.f32 %v398, %v399
    %v401 = vrot.slane %v400, 2
    %v402 = vadd.f32 %v400, %v401
    %v403 = vrot.slane %v402, 1
    %v404 = vadd.f32 %v402, %v403
    %v405 = vadd.f32 %v306, %v309
    %v406 = vrot.slane %v405, 4
    %v407 = vadd.f32 %v405, %v406
    %v408 = vrot.slane %v407, 2
    %v409 = vadd.f32 %v407, %v408
    %v410 = vrot.slane %v409, 1
    %v411 = vadd.f32 %v409, %v410
    %v412 = vadd.f32 %v307, %v310
    %v413 = vrot.slane %v412, 4
    %v414 = vadd.f32 %v412, %v413
    %v415 = vrot.slane %v414, 2
    %v416 = vadd.f32 %v414, %v415
    %v417 = vrot.slane %v416, 1
    %v418 = vadd.f32 %v416, %v417
    %v419 = vadd.f32 %v311, %v314
    %v420 = vrot.slane %v419, 4
    %v421 = vadd.f32 %v419, %v420
    %v422 = vrot.slane %v421, 2
    %v423 = vadd.f32 %v421, %v422
    %v424 = vrot.slane %v423, 1
    %v425 = vadd.f32 %v423, %v424
    %v426 = vadd.f32 %v312, %v315
    %v427 = vrot.slane %v426, 4
    %v428 = vadd.f32 %v426, %v427
    %v429 = vrot.slane %v428, 2
    %v430 = vadd.f32 %v428, %v429
    %v431 = vrot.slane %v430, 1
    %v432 = vadd.f32 %v430, %v431
    %v433 = vadd.f32 %v313, %v316
    %v434 = vrot.slane %v433, 4
    %v435 = vadd.f32 %v433, %v434
    %v436 = vrot.slane %v435, 2
    %v437 = vadd.f32 %v435, %v436
    %v438 = vrot.slane %v437, 1
    %v439 = vadd.f32 %v437, %v438
    %v440 = vadd.f32 %v317, %v320
    %v441 = vrot.slane %v440, 4
    %v442 = vadd.f32 %v440, %v441
    %v443 = vrot.slane %v442, 2
    %v444 = vadd.f32 %v442, %v443
    %v445 = vrot.slane %v444, 1
    %v446 = vadd.f32 %v444, %v445
    %v447 = vadd.f32 %v318, %v321
    %v448 = vrot.slane %v447, 4
    %v449 = vadd.f32 %v447, %v448
    %v450 = vrot.slane %v449, 2
    %v451 = vadd.f32 %v449, %v450
    %v452 = vrot.slane %v451, 1
    %v453 = vadd.f32 %v451, %v452
    %v454 = vadd.f32 %v319, %v322
    %v455 = vrot.slane %v454, 4
    %v456 = vadd.f32 %v454, %v455
    %v457 = vrot.slane %v456, 2
    %v458 = vadd.f32 %v456, %v457
    %v459 = vrot.slane %v458, 1
    %v460 = vadd.f32 %v458, %v459
    %v461 = vadd.f32 %v323, %v326
    %v462 = vrot.slane %v461, 4
    %v463 = vadd.f32 %v461, %v462
    %v464 = vrot.slane %v463, 2
    %v465 = vadd.f32 %v463, %v464
    %v466 = vrot.slane %v465, 1
    %v467 = vadd.f32 %v465, %v466
    %v468 = vadd.f32 %v324, %v327
    %v469 = vrot.slane %v468, 4
    %v470 = vadd.f32 %v468, %v469
    %v471 = vrot.slane %v470, 2
    %v472 = vadd.f32 %v470, %v471
    %v473 = vrot.slane %v472, 1
    %v474 = vadd.f32 %v472, %v473
    %v475 = vadd.f32 %v325, %v328
    %v476 = vrot.slane %v475, 4
    %v477 = vadd.f32 %v475, %v476
    %v478 = vrot.slane %v477, 2
    %v479 = vadd.f32 %v477, %v478
    %v480 = vrot.slane %v479, 1
    %v481 = vadd.f32 %v479, %v480
    %v482 = vadd.f32 %v329, %v332
    %v483 = vrot.slane %v482, 4
    %v484 = vadd.f32 %v482, %v483
    %v485 = vrot.slane %v484, 2
    %v486 = vadd.f32 %v484, %v485
    %v487 = vrot.slane %v486, 1
    %v488 = vadd.f32 %v486, %v487
    %v489 = vadd.f32 %v330, %v333
    %v490 = vrot.slane %v489, 4
    %v491 = vadd.f32 %v489, %v490
    %v492 = vrot.slane %v491, 2
    %v493 = vadd.f32 %v491, %v492
    %v494 = vrot.slane %v493, 1
    %v495 = vadd.f32 %v493, %v494
    %v496 = vadd.f32 %v331, %v334
    %v497 = vrot.slane %v496, 4
    %v498 = vadd.f32 %v496, %v497
    %v499 = vrot.slane %v498, 2
    %v500 = vadd.f32 %v498, %v499
    %v501 = vrot.slane %v500, 1
    %v502 = vadd.f32 %v500, %v501
    %vm527 = vcmask 1041409
    %v528 = vsel %vm527, %v146, %v125
    %vm529 = vcmask 1042434
    %v530 = vsel %vm529, %v167, %v528
    %vm531 = vcmask 1043459
    %v532 = vsel %vm531, %v188, %v530
    %vm533 = vcmask 1044484
    %v534 = vsel %vm533, %v209, %v532
    %vm535 = vcmask 1045509
    %v536 = vsel %vm535, %v230, %v534
    %vm537 = vcmask 1046534
    %v538 = vsel %vm537, %v251, %v536
    %vm539 = vcmask 1047559
    %v540 = vsel %vm539, %v272, %v538
    %v541 = vsel %vm527, %v153, %v132
    %v542 = vsel %vm529, %v174, %v541
    %v543 = vsel %vm531, %v195, %v542
    %v544 = vsel %vm533, %v216, %v543
    %v545 = vsel %vm535, %v237, %v544
    %v546 = vsel %vm537, %v258, %v545
    %v547 = vsel %vm539, %v279, %v546
    %v548 = vsel %vm527, %v160, %v139
    %v549 = vsel %vm529, %v181, %v548
    %v550 = vsel %vm531, %v202, %v549
    %v551 = vsel %vm533, %v223, %v550
    %v552 = vsel %vm535, %v244, %v551
    %v553 = vsel %vm537, %v265, %v552
    %v554 = vsel %vm539, %v286, %v553
    %v582 = vsel %vm527, %v362, %v341
    %v583 = vsel %vm529, %v383, %v582
    %v584 = vsel %vm531, %v404, %v583
    %v585 = vsel %vm533, %v425, %v584
    %v586 = vsel %vm535, %v446, %v585
    %v587 = vsel %vm537, %v467, %v586
    %v588 = vsel %vm539, %v488, %v587
    %v589 = vsel %vm527, %v369, %v348
    %v590 = vsel %vm529, %v390, %v589
    %v591 = vsel %vm531, %v411, %v590
    %v592 = vsel %vm533, %v432, %v591
    %v593 = vsel %vm535, %v453, %v592
    %v594 = vsel %vm537, %v474, %v593
    %v595 = vsel %vm539, %v495, %v594
    %v596 = vsel %vm527, %v376, %v355
    %v597 = vsel %vm529, %v397, %v596
    %v598 = vsel %vm531, %v418, %v597
    %v599 = vsel %vm533, %v439, %v598
    %v600 = vsel %vm535, %v460, %v599
    %v601 = vsel %vm537, %v481, %v600
    %v602 = vsel %vm539, %v502, %v601
    %v606 = vld [vmem:[%s3] sm:$0xff]
    %v607 = vld [vmem:[%s3 + $0x8] sm:$0xff]
    %v608 = vld [vmem:[%s3 + $0x10] sm:$0xff]
    %v609 = vld [vmem:[%s3 + $0x18] sm:$0xff]
    %v610 = vld [vmem:[%s3 + $0x20] sm:$0xff]
    %v611 = vld [vmem:[%s3 + $0x28] sm:$0xff]
    %v612 = vld [vmem:[%s3 + $0x30] sm:$0xff]
    %v613 = vld [vmem:[%s3 + $0x38] sm:$0xff]
    %v614 = vld [vmem:[%s3 + $0x40] sm:$0xff]
    %v615 = vld [vmem:[%s3 + $0x48] sm:$0xff]
    %v616 = vld [vmem:[%s3 + $0x50] sm:$0xff]
    %v617 = vld [vmem:[%s3 + $0x58] sm:$0xff]
    %v618 = vld [vmem:[%s3 + $0x60] sm:$0xff]
    %v619 = vld [vmem:[%s3 + $0x68] sm:$0xff]
    %v620 = vld [vmem:[%s3 + $0x70] sm:$0xff]
    %v621 = vld [vmem:[%s3 + $0x78] sm:$0xff]
    %v622 = vld [vmem:[%s3 + $0x80] sm:$0xff]
    %v623 = vld [vmem:[%s3 + $0x88] sm:$0xff]
    %v624 = vld [vmem:[%s3 + $0x90] sm:$0xff]
    %v625 = vld [vmem:[%s3 + $0x98] sm:$0xff]
    %v626 = vld [vmem:[%s3 + $0xa0] sm:$0xff]
    %v627 = vld [vmem:[%s3 + $0xa8] sm:$0xff]
    %v628 = vld [vmem:[%s3 + $0xb0] sm:$0xff]
    %v629 = vld [vmem:[%s3 + $0xb8] sm:$0xff]
    %v630 = vld [vmem:[%s3 + $0xc0] sm:$0xff]
    %v631 = vld [vmem:[%s3 + $0xc8] sm:$0xff]
    %v632 = vld [vmem:[%s3 + $0xd0] sm:$0xff]
    %v633 = vld [vmem:[%s3 + $0xd8] sm:$0xff]
    %v634 = vld [vmem:[%s3 + $0xe0] sm:$0xff]
    %v635 = vld [vmem:[%s3 + $0xe8] sm:$0xff]
    %v636 = vld [vmem:[%s3 + $0xf0] sm:$0xff]
    %v637 = vld [vmem:[%s3 + $0xf8] sm:$0xff]
    %v638 = vld [vmem:[%s3 + $0x100] sm:$0xff]
    %v639 = vld [vmem:[%s3 + $0x108] sm:$0xff]
    %v640 = vld [vmem:[%s3 + $0x110] sm:$0xff]
    %v641 = vld [vmem:[%s3 + $0x118] sm:$0xff]
    %v642 = vld [vmem:[%s3 + $0x120] sm:$0xff]
    %v643 = vld [vmem:[%s3 + $0x128] sm:$0xff]
    %v644 = vld [vmem:[%s3 + $0x130] sm:$0xff]
    %v645 = vld [vmem:[%s3 + $0x138] sm:$0xff]
    %v646 = vld [vmem:[%s3 + $0x140] sm:$0xff]
    %v647 = vld [vmem:[%s3 + $0x148] sm:$0xff]
    %v648 = vld [vmem:[%s3 + $0x150] sm:$0xff]
    %v649 = vld [vmem:[%s3 + $0x158] sm:$0xff]
    %v650 = vld [vmem:[%s3 + $0x160] sm:$0xff]
    %v651 = vld [vmem:[%s3 + $0x168] sm:$0xff]
    %v652 = vld [vmem:[%s3 + $0x170] sm:$0xff]
    %v653 = vld [vmem:[%s3 + $0x178] sm:$0xff]
    %654 = vmatprep.subr.mxu0 0.0
    %655 = vmatpush1.msra.mxu0 %v606
    %656 = vmatprep.subr.mxu0 0.0
    %657 = vmatpush1.msra.mxu0 %v607
    %658 = vmatprep.subr.mxu0 0.0
    %659 = vmatpush1.msra.mxu0 %v608
    %660 = vmatprep.subr.mxu0 0.0
    %661 = vmatpush1.msra.mxu0 %v609
    %662 = vmatprep.subr.mxu0 0.0
    %663 = vmatpush1.msra.mxu0 %v610
    %664 = vmatprep.subr.mxu0 0.0
    %665 = vmatpush1.msra.mxu0 %v611
    %666 = vmatprep.subr.mxu0 0.0
    %667 = vmatpush1.msra.mxu0 %v612
    %668 = vmatprep.subr.mxu0 0.0
    %669 = vmatpush1.msra.mxu0 %v613
    %670 = vmatprep.subr.mxu0 0.0
    %671 = vmatpush1.msra.mxu0 %v614
    %672 = vmatprep.subr.mxu0 0.0
    %673 = vmatpush1.msra.mxu0 %v615
    %674 = vmatprep.subr.mxu0 0.0
    %675 = vmatpush1.msra.mxu0 %v616
    %676 = vmatprep.subr.mxu0 0.0
    %677 = vmatpush1.msra.mxu0 %v617
    %678 = vmatprep.subr.mxu0 0.0
    %679 = vmatpush1.msra.mxu0 %v618
    %680 = vmatprep.subr.mxu0 0.0
    %681 = vmatpush1.msra.mxu0 %v619
    %682 = vmatprep.subr.mxu0 0.0
    %683 = vmatpush1.msra.mxu0 %v620
    %684 = vmatprep.subr.mxu0 0.0
    %685 = vmatpush1.msra.mxu0 %v621
    %686 = vmatprep.subr.mxu0 0.0
    %687 = vmatpush1.msra.mxu0 %v622
    %688 = vmatprep.subr.mxu0 0.0
    %689 = vmatpush1.msra.mxu0 %v623
    %690 = vmatprep.subr.mxu0 0.0
    %691 = vmatpush1.msra.mxu0 %v624
    %692 = vmatprep.subr.mxu0 0.0
    %693 = vmatpush1.msra.mxu0 %v625
    %694 = vmatprep.subr.mxu0 0.0
    %695 = vmatpush1.msra.mxu0 %v626
    %696 = vmatprep.subr.mxu0 0.0
    %697 = vmatpush1.msra.mxu0 %v627
    %698 = vmatprep.subr.mxu0 0.0
    %699 = vmatpush1.msra.mxu0 %v628
    %700 = vmatprep.subr.mxu0 0.0
    %701 = vmatpush1.msra.mxu0 %v629
    %702 = vmatprep.subr.mxu0 0.0
    %703 = vmatpush1.msra.mxu0 %v630
    %704 = vmatprep.subr.mxu0 0.0
    %705 = vmatpush1.msra.mxu0 %v631
    %706 = vmatprep.subr.mxu0 0.0
    %707 = vmatpush1.msra.mxu0 %v632
    %708 = vmatprep.subr.mxu0 0.0
    %709 = vmatpush1.msra.mxu0 %v633
    %710 = vmatprep.subr.mxu0 0.0
    %711 = vmatpush1.msra.mxu0 %v634
    %712 = vmatprep.subr.mxu0 0.0
    %713 = vmatpush1.msra.mxu0 %v635
    %714 = vmatprep.subr.mxu0 0.0
    %715 = vmatpush1.msra.mxu0 %v636
    %716 = vmatprep.subr.mxu0 0.0
    %717 = vmatpush1.msra.mxu0 %v637
    %718 = vmatprep.mubr.f32.mxu0 %v547
    %719 = vmatmul.mubr.f32.gmra.mrb[0].mxu0 %v540
    %v720 = vpop.f32.mrb[0].mxu0
    %v721 = vadd.f32 0.0, %v720
    %v722 = vpop.f32.mrb[0].mxu0
    %723 = vmatprep.mubr.f32.mxu0 %v595
    %724 = vmatmul.mubr.f32.gmra.mrb[0].mxu0 %v588
    %v725 = vpop.f32.mrb[0].mxu0
    %v726 = vadd.f32 0.0, %v725
    %v727 = vpop.f32.mrb[0].mxu0
    %728 = vdwg.mxu0
    %729 = vmatprep.subr.mxu0 0.0
    %730 = vmatpush1.msra.mxu0 %v638
    %731 = vmatprep.subr.mxu0 0.0
    %732 = vmatpush1.msra.mxu0 %v639
    %733 = vmatprep.subr.mxu0 0.0
    %734 = vmatpush1.msra.mxu0 %v640
    %735 = vmatprep.subr.mxu0 0.0
    %736 = vmatpush1.msra.mxu0 %v641
    %737 = vmatprep.subr.mxu0 0.0
    %738 = vmatpush1.msra.mxu0 %v642
    %739 = vmatprep.subr.mxu0 0.0
    %740 = vmatpush1.msra.mxu0 %v643
    %741 = vmatprep.subr.mxu0 0.0
    %742 = vmatpush1.msra.mxu0 %v644
    %743 = vmatprep.subr.mxu0 0.0
    %744 = vmatpush1.msra.mxu0 %v645
    %745 = vmatprep.subr.mxu0 0.0
    %746 = vmatpush1.msra.mxu0 %v646
    %747 = vmatprep.subr.mxu0 0.0
    %748 = vmatpush1.msra.mxu0 %v647
    %749 = vmatprep.subr.mxu0 0.0
    %750 = vmatpush1.msra.mxu0 %v648
    %751 = vmatprep.subr.mxu0 0.0
    %752 = vmatpush1.msra.mxu0 %v649
    %753 = vmatprep.subr.mxu0 0.0
    %754 = vmatpush1.msra.mxu0 %v650
    %755 = vmatprep.subr.mxu0 0.0
    %756 = vmatpush1.msra.mxu0 %v651
    %757 = vmatprep.subr.mxu0 0.0
    %758 = vmatpush1.msra.mxu0 %v652
    %759 = vmatprep.subr.mxu0 0.0
    %760 = vmatpush1.msra.mxu0 %v653
    %761 = vmatprep.subr.mxu0 0.0
    %762 = vmatpush1.msra.mxu0 0.0
    %763 = vmatprep.subr.mxu0 0.0
    %764 = vmatpush1.msra.mxu0 0.0
    %765 = vmatprep.subr.mxu0 0.0
    %766 = vmatpush1.msra.mxu0 0.0
    %767 = vmatprep.subr.mxu0 0.0
    %768 = vmatpush1.msra.mxu0 0.0
    %769 = vmatprep.subr.mxu0 0.0
    %770 = vmatpush1.msra.mxu0 0.0
    %771 = vmatprep.subr.mxu0 0.0
    %772 = vmatpush1.msra.mxu0 0.0
    %773 = vmatprep.subr.mxu0 0.0
    %774 = vmatpush1.msra.mxu0 0.0
    %775 = vmatprep.subr.mxu0 0.0
    %776 = vmatpush1.msra.mxu0 0.0
    %777 = vmatprep.subr.mxu0 0.0
    %778 = vmatpush1.msra.mxu0 0.0
    %779 = vmatprep.subr.mxu0 0.0
    %780 = vmatpush1.msra.mxu0 0.0
    %781 = vmatprep.subr.mxu0 0.0
    %782 = vmatpush1.msra.mxu0 0.0
    %783 = vmatprep.subr.mxu0 0.0
    %784 = vmatpush1.msra.mxu0 0.0
    %785 = vmatprep.subr.mxu0 0.0
    %786 = vmatpush1.msra.mxu0 0.0
    %787 = vmatprep.subr.mxu0 0.0
    %788 = vmatpush1.msra.mxu0 0.0
    %789 = vmatprep.subr.mxu0 0.0
    %790 = vmatpush1.msra.mxu0 0.0
    %791 = vmatprep.subr.mxu0 0.0
    %792 = vmatpush1.msra.mxu0 0.0
    %793 = vmatprep.mubr.f32.mxu0 0.0
    %794 = vmatmul.mubr.f32.gmra.mrb[0].mxu0 %v554
    %v795 = vpop.f32.mrb[0].mxu0
    %v796 = vadd.f32 %v721, %v795
    %v797 = vpop.f32.mrb[0].mxu0
    %798 = vmatprep.mubr.f32.mxu0 0.0
    %799 = vmatmul.mubr.f32.gmra.mrb[0].mxu0 %v602
    %v800 = vpop.f32.mrb[0].mxu0
    %v801 = vadd.f32 %v726, %v800
    %v802 = vpop.f32.mrb[0].mxu0
    %803 = vdwg.mxu0
    %v804 = vld [vmem:[%s2] sm:$0xff]
    %v805 = vld [vmem:[%s2 + $0x8] sm:$0xff]
    %v806 = vrcp.pop %v804
    %v807 = vrcp.pop %v805
    %809 = vset.pattern.permute.xlu0 0
    %810 = vperm.xlu0 %809, %v806
    %v811 = vpop.permute.xlu0 %810
    %814 = vset.pattern.permute.xlu0 0
    %815 = vperm.xlu0 %814, %v807
    %v816 = vpop.permute.xlu0 %815
    %v818 = vmul.f32 %v796, %v811
    %v819 = vmul.f32 %v801, %v816
    %v820 = vld [vmem:[%s4] sm:$0x1]
    %v822 = vlaneseq
    %v823 = vshrl.u32 %v822, 7
    %v824 = vsub.s32 0, %v823
    %v825 = vrot.slane %v820, %v824
    %v827 = vadd.f32 %v818, %v825
    %v828 = vadd.f32 %v819, %v825
    %v829 = vld [vmem:[#allocation5] sm:$0xff]
    %v830 = vld [vmem:[#allocation5 + $0x8] sm:$0xff]
    %v831 = vld [vmem:[#allocation5 + $0x10] sm:$0xff]
    %v832 = vld [vmem:[#allocation5 + $0x18] sm:$0xff]
    %v833 = vld [vmem:[#allocation5 + $0x20] sm:$0xff]
    %v834 = vld [vmem:[#allocation5 + $0x28] sm:$0xff]
    %v835 = vld [vmem:[#allocation5 + $0x30] sm:$0xff]
    %v836 = vld [vmem:[#allocation5 + $0x38] sm:$0xff]
    %s837 = scalar_lea.vmem [#allocation5], 64
    %v838 = vld [vmem:[%s837] sm:$0xff]
    %v839 = vld [vmem:[%s837 + $0x8] sm:$0xff]
    %v840 = vld [vmem:[%s837 + $0x10] sm:$0xff]
    %v841 = vld [vmem:[%s837 + $0x18] sm:$0xff]
    %v842 = vld [vmem:[%s837 + $0x20] sm:$0xff]
    %v843 = vld [vmem:[%s837 + $0x28] sm:$0xff]
    %v844 = vld [vmem:[%s837 + $0x30] sm:$0xff]
    %v845 = vld [vmem:[%s837 + $0x38] sm:$0xff]
    %vm846 = vcmask 523264
    %v848 = vsel %vm846, %v828, 0
    %850 = vmatprep.subr.mxu0 0.0
    %851 = vmatpush1.msra.mxu0 %v838
    %852 = vmatprep.subr.mxu0 0.0
    %853 = vmatpush1.msra.mxu0 %v839
    %854 = vmatprep.subr.mxu0 0.0
    %855 = vmatpush1.msra.mxu0 %v840
    %856 = vmatprep.subr.mxu0 0.0
    %857 = vmatpush1.msra.mxu0 %v841
    %858 = vmatprep.subr.mxu0 0.0
    %859 = vmatpush1.msra.mxu0 %v842
    %860 = vmatprep.subr.mxu0 0.0
    %861 = vmatpush1.msra.mxu0 %v843
    %862 = vmatprep.subr.mxu0 0.0
    %863 = vmatpush1.msra.mxu0 %v844
    %864 = vmatprep.subr.mxu0 0.0
    %865 = vmatpush1.msra.mxu0 %v845
    %866 = vmatprep.subr.mxu0 0.0
    %867 = vmatpush1.msra.mxu0 0.0
    %868 = vmatprep.subr.mxu0 0.0
    %869 = vmatpush1.msra.mxu0 0.0
    %870 = vmatprep.subr.mxu0 0.0
    %871 = vmatpush1.msra.mxu0 0.0
    %872 = vmatprep.subr.mxu0 0.0
    %873 = vmatpush1.msra.mxu0 0.0
    %874 = vmatprep.subr.mxu0 0.0
    %875 = vmatpush1.msra.mxu0 0.0
    %876 = vmatprep.subr.mxu0 0.0
    %877 = vmatpush1.msra.mxu0 0.0
    %878 = vmatprep.subr.mxu0 0.0
    %879 = vmatpush1.msra.mxu0 0.0
    %880 = vmatprep.subr.mxu0 0.0
    %881 = vmatpush1.msra.mxu0 0.0
    %882 = vmatprep.subr.mxu0 0.0
    %883 = vmatpush1.msra.mxu0 0.0
    %884 = vmatprep.subr.mxu0 0.0
    %885 = vmatpush1.msra.mxu0 0.0
    %886 = vmatprep.subr.mxu0 0.0
    %887 = vmatpush1.msra.mxu0 0.0
    %888 = vmatprep.subr.mxu0 0.0
    %889 = vmatpush1.msra.mxu0 0.0
    %890 = vmatprep.subr.mxu0 0.0
    %891 = vmatpush1.msra.mxu0 0.0
    %892 = vmatprep.subr.mxu0 0.0
    %893 = vmatpush1.msra.mxu0 0.0
    %894 = vmatprep.subr.mxu0 0.0
    %895 = vmatpush1.msra.mxu0 0.0
    %896 = vmatprep.subr.mxu0 0.0
    %897 = vmatpush1.msra.mxu0 0.0
    %898 = vmatprep.subr.mxu0 0.0
    %899 = vmatpush1.msra.mxu0 0.0
    %900 = vmatprep.subr.mxu0 0.0
    %901 = vmatpush1.msra.mxu0 0.0
    %902 = vmatprep.subr.mxu0 0.0
    %903 = vmatpush1.msra.mxu0 0.0
    %904 = vmatprep.subr.mxu0 0.0
    %905 = vmatpush1.msra.mxu0 0.0
    %906 = vmatprep.subr.mxu0 0.0
    %907 = vmatpush1.msra.mxu0 0.0
    %908 = vmatprep.subr.mxu0 0.0
    %909 = vmatpush1.msra.mxu0 0.0
    %910 = vmatprep.subr.mxu0 0.0
    %911 = vmatpush1.msra.mxu0 0.0
    %912 = vmatprep.subr.mxu0 0.0
    %913 = vmatpush1.msra.mxu0 0.0
    %914 = vmatprep.mubr.f32.mxu0 0.0
    %915 = vmatmul.mubr.f32.gmra.mrb[0].mxu0 %v848
    %v916 = vpop.f32.mrb[0].mxu0
    %v917 = vadd.f32 0.0, %v916
    %v918 = vpop.f32.mrb[0].mxu0
    %919 = vdwg.mxu0
    %v921 = vsel %vm846, %v827, 0
    %923 = vmatprep.subr.mxu0 0.0
    %924 = vmatpush1.msra.mxu0 %v829
    %925 = vmatprep.subr.mxu0 0.0
    %926 = vmatpush1.msra.mxu0 %v830
    %927 = vmatprep.subr.mxu0 0.0
    %928 = vmatpush1.msra.mxu0 %v831
    %929 = vmatprep.subr.mxu0 0.0
    %930 = vmatpush1.msra.mxu0 %v832
    %931 = vmatprep.subr.mxu0 0.0
    %932 = vmatpush1.msra.mxu0 %v833
    %933 = vmatprep.subr.mxu0 0.0
    %934 = vmatpush1.msra.mxu0 %v834
    %935 = vmatprep.subr.mxu0 0.0
    %936 = vmatpush1.msra.mxu0 %v835
    %937 = vmatprep.subr.mxu0 0.0
    %938 = vmatpush1.msra.mxu0 %v836
    %939 = vmatprep.subr.mxu0 0.0
    %940 = vmatpush1.msra.mxu0 0.0
    %941 = vmatprep.subr.mxu0 0.0
    %942 = vmatpush1.msra.mxu0 0.0
    %943 = vmatprep.subr.mxu0 0.0
    %944 = vmatpush1.msra.mxu0 0.0
    %945 = vmatprep.subr.mxu0 0.0
    %946 = vmatpush1.msra.mxu0 0.0
    %947 = vmatprep.subr.mxu0 0.0
    %948 = vmatpush1.msra.mxu0 0.0
    %949 = vmatprep.subr.mxu0 0.0
    %950 = vmatpush1.msra.mxu0 0.0
    %951 = vmatprep.subr.mxu0 0.0
    %952 = vmatpush1.msra.mxu0 0.0
    %953 = vmatprep.subr.mxu0 0.0
    %954 = vmatpush1.msra.mxu0 0.0
    %955 = vmatprep.subr.mxu0 0.0
    %956 = vmatpush1.msra.mxu0 0.0
    %957 = vmatprep.subr.mxu0 0.0
    %958 = vmatpush1.msra.mxu0 0.0
    %959 = vmatprep.subr.mxu0 0.0
    %960 = vmatpush1.msra.mxu0 0.0
    %961 = vmatprep.subr.mxu0 0.0
    %962 = vmatpush1.msra.mxu0 0.0
    %963 = vmatprep.subr.mxu0 0.0
    %964 = vmatpush1.msra.mxu0 0.0
    %965 = vmatprep.subr.mxu0 0.0
    %966 = vmatpush1.msra.mxu0 0.0
    %967 = vmatprep.subr.mxu0 0.0
    %968 = vmatpush1.msra.mxu0 0.0
    %969 = vmatprep.subr.mxu0 0.0
    %970 = vmatpush1.msra.mxu0 0.0
    %971 = vmatprep.subr.mxu0 0.0
    %972 = vmatpush1.msra.mxu0 0.0
    %973 = vmatprep.subr.mxu0 0.0
    %974 = vmatpush1.msra.mxu0 0.0
    %975 = vmatprep.subr.mxu0 0.0
    %976 = vmatpush1.msra.mxu0 0.0
    %977 = vmatprep.subr.mxu0 0.0
    %978 = vmatpush1.msra.mxu0 0.0
    %979 = vmatprep.subr.mxu0 0.0
    %980 = vmatpush1.msra.mxu0 0.0
    %981 = vmatprep.subr.mxu0 0.0
    %982 = vmatpush1.msra.mxu0 0.0
    %983 = vmatprep.subr.mxu0 0.0
    %984 = vmatpush1.msra.mxu0 0.0
    %985 = vmatprep.subr.mxu0 0.0
    %986 = vmatpush1.msra.mxu0 0.0
    %987 = vmatprep.mubr.f32.mxu0 0.0
    %988 = vmatmul.mubr.f32.gmra.mrb[0].mxu0 %v921
    %v989 = vpop.f32.mrb[0].mxu0
    %v990 = vadd.f32 %v917, %v989
    %v991 = vpop.f32.mrb[0].mxu0
    %992 = vdwg.mxu0
    %v993 = vsub.f32 %v827, %v828
    %v994 = vand.u32 2147483647, %v993
    %s995 = scalar_lea.vmem [#allocation5], 128
    %v996 = vld [vmem:[%s995] sm:$0xff]
    %v997 = vld [vmem:[%s995 + $0x8] sm:$0xff]
    %v998 = vld [vmem:[%s995 + $0x10] sm:$0xff]
    %v999 = vld [vmem:[%s995 + $0x18] sm:$0xff]
    %v1000 = vld [vmem:[%s995 + $0x20] sm:$0xff]
    %v1001 = vld [vmem:[%s995 + $0x28] sm:$0xff]
    %v1002 = vld [vmem:[%s995 + $0x30] sm:$0xff]
    %v1003 = vld [vmem:[%s995 + $0x38] sm:$0xff]
    %v1005 = vsel %vm846, %v994, 0
    %1007 = vmatprep.subr.mxu0 0.0
    %1008 = vmatpush1.msra.mxu0 %v996
    %1009 = vmatprep.subr.mxu0 0.0
    %1010 = vmatpush1.msra.mxu0 %v997
    %1011 = vmatprep.subr.mxu0 0.0
    %1012 = vmatpush1.msra.mxu0 %v998
    %1013 = vmatprep.subr.mxu0 0.0
    %1014 = vmatpush1.msra.mxu0 %v999
    %1015 = vmatprep.subr.mxu0 0.0
    %1016 = vmatpush1.msra.mxu0 %v1000
    %1017 = vmatprep.subr.mxu0 0.0
    %1018 = vmatpush1.msra.mxu0 %v1001
    %1019 = vmatprep.subr.mxu0 0.0
    %1020 = vmatpush1.msra.mxu0 %v1002
    %1021 = vmatprep.subr.mxu0 0.0
    %1022 = vmatpush1.msra.mxu0 %v1003
    %1023 = vmatprep.subr.mxu0 0.0
    %1024 = vmatpush1.msra.mxu0 0.0
    %1025 = vmatprep.subr.mxu0 0.0
    %1026 = vmatpush1.msra.mxu0 0.0
    %1027 = vmatprep.subr.mxu0 0.0
    %1028 = vmatpush1.msra.mxu0 0.0
    %1029 = vmatprep.subr.mxu0 0.0
    %1030 = vmatpush1.msra.mxu0 0.0
    %1031 = vmatprep.subr.mxu0 0.0
    %1032 = vmatpush1.msra.mxu0 0.0
    %1033 = vmatprep.subr.mxu0 0.0
    %1034 = vmatpush1.msra.mxu0 0.0
    %1035 = vmatprep.subr.mxu0 0.0
    %1036 = vmatpush1.msra.mxu0 0.0
    %1037 = vmatprep.subr.mxu0 0.0
    %1038 = vmatpush1.msra.mxu0 0.0
    %1039 = vmatprep.subr.mxu0 0.0
    %1040 = vmatpush1.msra.mxu0 0.0
    %1041 = vmatprep.subr.mxu0 0.0
    %1042 = vmatpush1.msra.mxu0 0.0
    %1043 = vmatprep.subr.mxu0 0.0
    %1044 = vmatpush1.msra.mxu0 0.0
    %1045 = vmatprep.subr.mxu0 0.0
    %1046 = vmatpush1.msra.mxu0 0.0
    %1047 = vmatprep.subr.mxu0 0.0
    %1048 = vmatpush1.msra.mxu0 0.0
    %1049 = vmatprep.subr.mxu0 0.0
    %1050 = vmatpush1.msra.mxu0 0.0
    %1051 = vmatprep.subr.mxu0 0.0
    %1052 = vmatpush1.msra.mxu0 0.0
    %1053 = vmatprep.subr.mxu0 0.0
    %1054 = vmatpush1.msra.mxu0 0.0
    %1055 = vmatprep.subr.mxu0 0.0
    %1056 = vmatpush1.msra.mxu0 0.0
    %1057 = vmatprep.subr.mxu0 0.0
    %1058 = vmatpush1.msra.mxu0 0.0
    %1059 = vmatprep.subr.mxu0 0.0
    %1060 = vmatpush1.msra.mxu0 0.0
    %1061 = vmatprep.subr.mxu0 0.0
    %1062 = vmatpush1.msra.mxu0 0.0
    %1063 = vmatprep.subr.mxu0 0.0
    %1064 = vmatpush1.msra.mxu0 0.0
    %1065 = vmatprep.subr.mxu0 0.0
    %1066 = vmatpush1.msra.mxu0 0.0
    %1067 = vmatprep.subr.mxu0 0.0
    %1068 = vmatpush1.msra.mxu0 0.0
    %1069 = vmatprep.subr.mxu0 0.0
    %1070 = vmatpush1.msra.mxu0 0.0
    %1071 = vmatprep.mubr.f32.mxu0 0.0
    %1072 = vmatmul.mubr.f32.gmra.mrb[0].mxu0 %v1005
    %v1073 = vpop.f32.mrb[0].mxu0
    %v1074 = vadd.f32 0.0, %v1073
    %v1075 = vpop.f32.mrb[0].mxu0
    %1076 = vdwg.mxu0
    %v1077 = vadd.f32 %v990, %v1074
    %v1078 = vmul.f32 %v827, %v828
    %s1079 = scalar_lea.vmem [#allocation5], 192
    %v1080 = vld [vmem:[%s1079] sm:$0xff]
    %v1081 = vld [vmem:[%s1079 + $0x8] sm:$0xff]
    %v1082 = vld [vmem:[%s1079 + $0x10] sm:$0xff]
    %v1083 = vld [vmem:[%s1079 + $0x18] sm:$0xff]
    %v1084 = vld [vmem:[%s1079 + $0x20] sm:$0xff]
    %v1085 = vld [vmem:[%s1079 + $0x28] sm:$0xff]
    %v1086 = vld [vmem:[%s1079 + $0x30] sm:$0xff]
    %v1087 = vld [vmem:[%s1079 + $0x38] sm:$0xff]
    %v1089 = vsel %vm846, %v1078, 0
    %1091 = vmatprep.subr.mxu0 0.0
    %1092 = vmatpush1.msra.mxu0 %v1080
    %1093 = vmatprep.subr.mxu0 0.0
    %1094 = vmatpush1.msra.mxu0 %v1081
    %1095 = vmatprep.subr.mxu0 0.0
    %1096 = vmatpush1.msra.mxu0 %v1082
    %1097 = vmatprep.subr.mxu0 0.0
    %1098 = vmatpush1.msra.mxu0 %v1083
    %1099 = vmatprep.subr.mxu0 0.0
    %1100 = vmatpush1.msra.mxu0 %v1084
    %1101 = vmatprep.subr.mxu0 0.0
    %1102 = vmatpush1.msra.mxu0 %v1085
    %1103 = vmatprep.subr.mxu0 0.0
    %1104 = vmatpush1.msra.mxu0 %v1086
    %1105 = vmatprep.subr.mxu0 0.0
    %1106 = vmatpush1.msra.mxu0 %v1087
    %1107 = vmatprep.subr.mxu0 0.0
    %1108 = vmatpush1.msra.mxu0 0.0
    %1109 = vmatprep.subr.mxu0 0.0
    %1110 = vmatpush1.msra.mxu0 0.0
    %1111 = vmatprep.subr.mxu0 0.0
    %1112 = vmatpush1.msra.mxu0 0.0
    %1113 = vmatprep.subr.mxu0 0.0
    %1114 = vmatpush1.msra.mxu0 0.0
    %1115 = vmatprep.subr.mxu0 0.0
    %1116 = vmatpush1.msra.mxu0 0.0
    %1117 = vmatprep.subr.mxu0 0.0
    %1118 = vmatpush1.msra.mxu0 0.0
    %1119 = vmatprep.subr.mxu0 0.0
    %1120 = vmatpush1.msra.mxu0 0.0
    %1121 = vmatprep.subr.mxu0 0.0
    %1122 = vmatpush1.msra.mxu0 0.0
    %1123 = vmatprep.subr.mxu0 0.0
    %1124 = vmatpush1.msra.mxu0 0.0
    %1125 = vmatprep.subr.mxu0 0.0
    %1126 = vmatpush1.msra.mxu0 0.0
    %1127 = vmatprep.subr.mxu0 0.0
    %1128 = vmatpush1.msra.mxu0 0.0
    %1129 = vmatprep.subr.mxu0 0.0
    %1130 = vmatpush1.msra.mxu0 0.0
    %1131 = vmatprep.subr.mxu0 0.0
    %1132 = vmatpush1.msra.mxu0 0.0
    %1133 = vmatprep.subr.mxu0 0.0
    %1134 = vmatpush1.msra.mxu0 0.0
    %1135 = vmatprep.subr.mxu0 0.0
    %1136 = vmatpush1.msra.mxu0 0.0
    %1137 = vmatprep.subr.mxu0 0.0
    %1138 = vmatpush1.msra.mxu0 0.0
    %1139 = vmatprep.subr.mxu0 0.0
    %1140 = vmatpush1.msra.mxu0 0.0
    %1141 = vmatprep.subr.mxu0 0.0
    %1142 = vmatpush1.msra.mxu0 0.0
    %1143 = vmatprep.subr.mxu0 0.0
    %1144 = vmatpush1.msra.mxu0 0.0
    %1145 = vmatprep.subr.mxu0 0.0
    %1146 = vmatpush1.msra.mxu0 0.0
    %1147 = vmatprep.subr.mxu0 0.0
    %1148 = vmatpush1.msra.mxu0 0.0
    %1149 = vmatprep.subr.mxu0 0.0
    %1150 = vmatpush1.msra.mxu0 0.0
    %1151 = vmatprep.subr.mxu0 0.0
    %1152 = vmatpush1.msra.mxu0 0.0
    %1153 = vmatprep.subr.mxu0 0.0
    %1154 = vmatpush1.msra.mxu0 0.0
    %1155 = vmatprep.mubr.f32.mxu0 0.0
    %1156 = vmatmul.mubr.f32.gmra.mrb[0].mxu0 %v1089
    %v1157 = vpop.f32.mrb[0].mxu0
    %v1158 = vadd.f32 0.0, %v1157
    %v1159 = vpop.f32.mrb[0].mxu0
    %1160 = vdwg.mxu0
    %v1161 = vadd.f32 %v1077, %v1158
    %v1162 = vld [vmem:[%s6] sm:$0x1]
    %v1164 = vlaneseq
    %v1165 = vshrl.u32 %v1164, 7
    %v1166 = vsub.s32 0, %v1165
    %v1167 = vrot.slane %v1162, %v1166
    %v1169 = vadd.f32 %v1161, %v1167
    %v1170 = vmax.f32 %v1169, 0.0
    %v1171 = vld [vmem:[%s7] sm:$0xff]
    %v1172 = vld [vmem:[%s7 + $0x8] sm:$0xff]
    %v1173 = vld [vmem:[%s7 + $0x10] sm:$0xff]
    %v1174 = vld [vmem:[%s7 + $0x18] sm:$0xff]
    %v1175 = vld [vmem:[%s7 + $0x20] sm:$0xff]
    %v1176 = vld [vmem:[%s7 + $0x28] sm:$0xff]
    %v1177 = vld [vmem:[%s7 + $0x30] sm:$0xff]
    %v1178 = vld [vmem:[%s7 + $0x38] sm:$0xff]
    %v1179 = vld [vmem:[%s7 + $0x40] sm:$0xff]
    %v1180 = vld [vmem:[%s7 + $0x48] sm:$0xff]
    %v1181 = vld [vmem:[%s7 + $0x50] sm:$0xff]
    %v1182 = vld [vmem:[%s7 + $0x58] sm:$0xff]
    %v1183 = vld [vmem:[%s7 + $0x60] sm:$0xff]
    %v1184 = vld [vmem:[%s7 + $0x68] sm:$0xff]
    %v1185 = vld [vmem:[%s7 + $0x70] sm:$0xff]
    %v1186 = vld [vmem:[%s7 + $0x78] sm:$0xff]
    %v1187 = vld [vmem:[%s8] sm:$0x1]
    %v1189 = vlaneseq
    %v1190 = vshrl.u32 %v1189, 7
    %v1191 = vsub.s32 0, %v1190
    %v1192 = vrot.slane %v1187, %v1191
    %1194 = vmatprep.subr.mxu0 0.0
    %1195 = vmatpush1.msra.mxu0 %v1171
    %1196 = vmatprep.subr.mxu0 0.0
    %1197 = vmatpush1.msra.mxu0 %v1172
    %1198 = vmatprep.subr.mxu0 0.0
    %1199 = vmatpush1.msra.mxu0 %v1173
    %1200 = vmatprep.subr.mxu0 0.0
    %1201 = vmatpush1.msra.mxu0 %v1174
    %1202 = vmatprep.subr.mxu0 0.0
    %1203 = vmatpush1.msra.mxu0 %v1175
    %1204 = vmatprep.subr.mxu0 0.0
    %1205 = vmatpush1.msra.mxu0 %v1176
    %1206 = vmatprep.subr.mxu0 0.0
    %1207 = vmatpush1.msra.mxu0 %v1177
    %1208 = vmatprep.subr.mxu0 0.0
    %1209 = vmatpush1.msra.mxu0 %v1178
    %1210 = vmatprep.subr.mxu0 0.0
    %1211 = vmatpush1.msra.mxu0 %v1179
    %1212 = vmatprep.subr.mxu0 0.0
    %1213 = vmatpush1.msra.mxu0 %v1180
    %1214 = vmatprep.subr.mxu0 0.0
    %1215 = vmatpush1.msra.mxu0 %v1181
    %1216 = vmatprep.subr.mxu0 0.0
    %1217 = vmatpush1.msra.mxu0 %v1182
    %1218 = vmatprep.subr.mxu0 0.0
    %1219 = vmatpush1.msra.mxu0 %v1183
    %1220 = vmatprep.subr.mxu0 0.0
    %1221 = vmatpush1.msra.mxu0 %v1184
    %1222 = vmatprep.subr.mxu0 0.0
    %1223 = vmatpush1.msra.mxu0 %v1185
    %1224 = vmatprep.subr.mxu0 0.0
    %1225 = vmatpush1.msra.mxu0 %v1186
    %1226 = vmatprep.subr.mxu0 0.0
    %1227 = vmatpush1.msra.mxu0 0.0
    %1228 = vmatprep.subr.mxu0 0.0
    %1229 = vmatpush1.msra.mxu0 0.0
    %1230 = vmatprep.subr.mxu0 0.0
    %1231 = vmatpush1.msra.mxu0 0.0
    %1232 = vmatprep.subr.mxu0 0.0
    %1233 = vmatpush1.msra.mxu0 0.0
    %1234 = vmatprep.subr.mxu0 0.0
    %1235 = vmatpush1.msra.mxu0 0.0
    %1236 = vmatprep.subr.mxu0 0.0
    %1237 = vmatpush1.msra.mxu0 0.0
    %1238 = vmatprep.subr.mxu0 0.0
    %1239 = vmatpush1.msra.mxu0 0.0
    %1240 = vmatprep.subr.mxu0 0.0
    %1241 = vmatpush1.msra.mxu0 0.0
    %1242 = vmatprep.subr.mxu0 0.0
    %1243 = vmatpush1.msra.mxu0 0.0
    %1244 = vmatprep.subr.mxu0 0.0
    %1245 = vmatpush1.msra.mxu0 0.0
    %1246 = vmatprep.subr.mxu0 0.0
    %1247 = vmatpush1.msra.mxu0 0.0
    %1248 = vmatprep.subr.mxu0 0.0
    %1249 = vmatpush1.msra.mxu0 0.0
    %1250 = vmatprep.subr.mxu0 0.0
    %1251 = vmatpush1.msra.mxu0 0.0
    %1252 = vmatprep.subr.mxu0 0.0
    %1253 = vmatpush1.msra.mxu0 0.0
    %1254 = vmatprep.subr.mxu0 0.0
    %1255 = vmatpush1.msra.mxu0 0.0
    %1256 = vmatprep.subr.mxu0 0.0
    %1257 = vmatpush1.msra.mxu0 0.0
    %1258 = vmatprep.mubr.f32.mxu0 0.0
    %1259 = vmatmul.mubr.f32.gmra.mrb[0].mxu0 %v1170
    %v1260 = vpop.f32.mrb[0].mxu0
    %v1261 = vadd.f32 %v1192, %v1260
    %v1262 = vpop.f32.mrb[0].mxu0
    %1263 = vdwg.mxu0
    %1264 = vst [vmem:[#allocation7] sm:$0xff] %v1261
    %1265 = vmax.xlane.f32.xlu0 %v1261
    %v1266 = vpop.xlane.xlu0 %1265
    %v1267 = vsub.f32 %v1261, %v1266
    %v1268 = vmul.f32 %v1267, 1.442695
    %v1269 = vpow.pop %v1268
    %1270 = vadd.xlane.f32.xlu0 %v1269
    %v1271 = vpop.xlane.xlu0 %1270
    %v1272 = vlog2.pop %v1271
    %v1273 = vmul.f32 %v1272, 0.6931472
    %v1274 = vadd.f32 %v1266, %v1273
    %v1275 = vlaneseq
    %v1276 = vand.u32 %v1275, 127
    %v1277 = vld [vmem:[%s9] sm:$0xff]
    %1278 = vset.pattern.permute.xlu0 0
    %1279 = vperm.xlu0 %1278, %v1277
    %v1280 = vpop.permute.xlu0 %1279
    %vm1281 = vcmp.eq.s32.totalorder %v1276, %v1280
    %v1282 = vsel %vm1281, 1, 0
    %v1283 = vcvt.s32.f32 %v1282
    %v1284 = vmul.f32 %v1283, %v1261
    %1285 = vadd.xlane.f32.xlu0 %v1284
    %v1286 = vpop.xlane.xlu0 %1285
    %v1287 = vsub.f32 %v1274, %v1286
    %v1288 = vld [vmem:[%s10] sm:$0xff]
    %v1289 = vmul.f32 %v1288, %v1287
    %vm1290 = vcmask 7168
    %v1291 = vsel %vm1290, %v1289, 0.0
    %1292 = vadd.xlane.f32.xlu0 %v1291
    %v1293 = vpop.xlane.xlu0 %1292
    %v1294 = vrot.slane %v1293, 4
    %v1295 = vadd.f32 %v1293, %v1294
    %v1296 = vrot.slane %v1295, 2
    %v1297 = vadd.f32 %v1295, %v1296
    %v1298 = vrot.slane %v1297, 1
    %v1299 = vadd.f32 %v1297, %v1298
    %s1300 = vtos %v1299
    %v1301 = vrcp.pop 8.0
    %s1302 = vtos %v1301
    %s1303 = smul.f32 %s1300, %s1302
    %v1304 = vstv %s1303
    %vm1305 = vcmask 0
    %1306 = vst.msk [vmem:[#allocation8] sm:$0x1] %vm1305, %v1304
    %vm1307 = vcmp.ge.f32.partialorder %v1261, %v1266
    %v1308 = vsel %vm1307, %v1276, 128
    %v1309 = vand.u32 %v1308, 65535
    %v1310 = vshra.s32 %v1308, 16
    %v1311 = vcvt.s32.f32 %v1309
    %v1312 = vcvt.s32.f32 %v1310
    %1313 = vmin.xlane.f32.xlu0 %v1312
    %v1314 = vpop.xlane.xlu0 %1313
    %vm1315 = vcmp.eq.f32.partialorder %v1312, %v1314
    %v1316 = vsel %vm1315, %v1311, inf
    %1317 = vmin.xlane.f32.xlu0 %v1316
    %v1318 = vpop.xlane.xlu0 %1317
    %v1319 = vcvt.f32.s32 %v1318
    %v1320 = vcvt.f32.s32 %v1314
    %v1321 = vshll.u32 %v1320, 16
    %v1322 = vadd.s32 %v1321, %v1319
    %1323 = vst.msk [vmem:[%s13] sm:$0xff] %vm1290, %v1322
    // Predicated region
    $region54: #{tpu_custom_call.1} parent=1 // pred_check
      _
    $region55: #{tpu_custom_call.1} parent=1 // pred_check_branch
      %1325 = sbr.rel (0) target = $region57
    $region56: #{tpu_custom_call.1} parent=1 // pred_region
      %s1327 = ssub.s32 128, 128
      %1328 = vsyncadd [#allocation4], %s1327
      %s1330 = sshll.u32 [#allocation7], 4
      %s1331 = int_to_ptr.vmem [resolvable:$true] %s1330
      %1333 = dma.vmem_to_hbm [thread:$0]  %s1331, 128, %s11, [#allocation4]
    $region57: #{tpu_custom_call.1} parent=1 // pred_fallthru
      _
    // Predicated region
    $region58: #{tpu_custom_call.1} parent=1 // pred_check
      _
    $region59: #{tpu_custom_call.1} parent=1 // pred_check_branch
      %1335 = sbr.rel (0) target = $region61
    $region60: #{tpu_custom_call.1} parent=1 // pred_region
      %s1337 = ssub.s32 16, 16
      %1338 = vsyncadd [#allocation9], %s1337
      %s1340 = sshll.u32 [#allocation8], 4
      %s1341 = int_to_ptr.vmem [resolvable:$true] %s1340
      %1343 = dma.vmem_to_hbm [thread:$0]  %s1341, 16, %s12, [#allocation9]
    $region61: #{tpu_custom_call.1} parent=1 // pred_fallthru
      _
    // Predicated region
    $region62: #{tpu_custom_call.1} parent=1 // pred_check
      _
    $region63: #{tpu_custom_call.1} parent=1 // pred_check_branch
      %1345 = sbr.rel (0) target = $region65
    $region64: #{tpu_custom_call.1} parent=1 // pred_region
      _
    $region65: #{tpu_custom_call.1} parent=1 // pred_fallthru
      _
    // Predicated region
    $region66: #{tpu_custom_call.1} parent=1 // pred_check
      _
    $region67: #{tpu_custom_call.1} parent=1 // pred_check_branch
      %1347 = sbr.rel (0) target = $region69
    $region68: #{tpu_custom_call.1} parent=1 // pred_region
      %1348 = dma.done [#allocation4], 128
    $region69: #{tpu_custom_call.1} parent=1 // pred_fallthru
      _
    // Predicated region
    $region70: #{tpu_custom_call.1} parent=1 // pred_check
      _
    $region71: #{tpu_custom_call.1} parent=1 // pred_check_branch
      %1350 = sbr.rel (0) target = $region73
    $region72: #{tpu_custom_call.1} parent=1 // pred_region
      %1351 = dma.done [#allocation9], 16
    $region73: #{tpu_custom_call.1} parent=1 // pred_fallthru
      _
    // Predicated region
    $region74: #{tpu_custom_call.1} parent=1 // pred_check
      _
    $region75: #{tpu_custom_call.1} parent=1 // pred_check_branch
      %1353 = sbr.rel (0) target = $region77
    $region76: #{tpu_custom_call.1} parent=1 // pred_region
      _
    $region77: #{tpu_custom_call.1} parent=1 // pred_fallthru
      _
    %1354 = vsyncpa [#allocation3], 1
    %1355 = vsyncpa [#allocation6], 1
    %1356 = vsyncpa [#allocation4], 1
    %1357 = vsyncpa [#allocation9], 1

</llo_original>
